<compile_context>
chip_gen: v7x
topology: tpu7x:2x2x1
jax: 0.10.0
libtpu: 0.0.40
codegen_flags: <defaults>
</compile_context>

<pallas_src>
import functools

import jax
import jax.numpy as jnp
import numpy as np
from jax.experimental import pallas as pl
from jax.experimental.pallas import tpu as pltpu

EPS = 1e-5  # PyTorch InstanceNorm2d default eps


def spade_kernel(x_ref, seg_ref, mask_ref, w1_ref, b1_ref, wgb_ref, bgb_ref,
                 out_ref, *, img_w):
    # Per grid step (one image), channels-first flattened layout:
    #   x_ref:    (1, Cn, H*W)  f32     seg_ref: (1, Cl, H*W) f32
    #   mask_ref: (9, H*W)      f32     (0/1 border-validity mask per 3x3 tap)
    #   w1_ref:   (nh, 9*Cl)    bf16    b1_ref:  (nh, 1)      f32
    #   wgb_ref:  (2*Cn, 9*nh)  bf16    bgb_ref: (2*Cn, 1)    f32
    #   out_ref:  (1, Cn, H*W)
    Cn, HW = x_ref.shape[1], x_ref.shape[2]
    W = img_w

    # Static per-tap lane-shift amounts (tap k = dy*3 + dx, matching HWIO weights).
    shifts = []
    for dy in range(3):
        for dx in range(3):
            s = (dy - 1) * W + (dx - 1)        # flat offset of the source pixel
            shifts.append((-s) % HW)           # jnp.roll convention: out[p] = in[p + s]

    def im2col(a_cf):
        # (C, H*W) f32 -> (9*C, H*W) bf16 im2col slab (tap-major rows).
        # Shift = cheap XLU lane rotation; border zeros via precomputed 0/1 mask.
        taps = []
        for k in range(9):
            t = a_cf if shifts[k] == 0 else pltpu.roll(a_cf, shift=shifts[k], axis=1)
            taps.append(t * mask_ref[k:k + 1, :])
        return jnp.concatenate(taps, axis=0).astype(jnp.bfloat16)

    # ---------------- InstanceNorm2d (affine=False, biased variance) ----------------
    x = x_ref[0].astype(jnp.float32)                               # (Cn, HW)
    mean = jnp.mean(x, axis=1, keepdims=True)
    var = jnp.mean(jnp.square(x - mean), axis=1, keepdims=True)
    normalized = (x - mean) * jax.lax.rsqrt(var + EPS)

    # ---------------- mlp_shared: 3x3 conv + ReLU, one wide-K matmul ----------------
    seg = seg_ref[0].astype(jnp.float32)                           # (Cl, HW)
    slab1 = im2col(seg)                                            # (9*Cl, HW) bf16
    actv = jnp.dot(w1_ref[...], slab1, preferred_element_type=jnp.float32)
    actv = jnp.maximum(actv + b1_ref[...], 0.0)                    # (nh, HW) f32

    # ----------- mlp_gamma & mlp_beta fused: one (2*Cn, 9*nh) x (9*nh, HW) GEMM ------
    slab2 = im2col(actv)                                           # (9*nh, HW) bf16
    gb = jnp.dot(wgb_ref[...], slab2, preferred_element_type=jnp.float32)
    gb = gb + bgb_ref[...]                                         # (2*Cn, HW) f32
    gamma = gb[:Cn, :]
    beta = gb[Cn:2 * Cn, :]

    # ---------------- SPADE modulation (lane-dense store) ----------------
    out_ref[0] = (normalized * (1.0 + gamma) + beta).astype(out_ref.dtype)


def _nearest_resize_nchw(seg, H, W):
    # Matches F.interpolate(..., mode='nearest'): src = floor(dst * in/out).
    N, C, Hs, Ws = seg.shape
    ih = (jnp.arange(H) * Hs) // H
    iw = (jnp.arange(W) * Ws) // W
    return seg[:, :, ih][:, :, :, iw]


def _border_masks(H, W):
    # 0/1 validity of the source pixel for each of the 9 taps, over the flat H*W grid.
    h = np.arange(H * W) // W
    w = np.arange(H * W) % W
    masks = []
    for dy in range(3):
        for dx in range(3):
            valid = ((h + dy - 1 >= 0) & (h + dy - 1 < H) &
                     (w + dx - 1 >= 0) & (w + dx - 1 < W))
            masks.append(valid.astype(np.float32))
    return jnp.asarray(np.stack(masks, axis=0))        # (9, H*W)


def spade_forward(x_nchw, segmap_nchw, w1, b1, wg, bg, wb, bb):
    """x: (N, Cn, H, W), segmap: (N, Cl, Hs, Ws); w*: (9, Cin, Cout) taps in
    (dy, dx) row-major order; b*: (1, Cout).  Returns (N, Cn, H, W)."""
    N, Cn, H, W = x_nchw.shape
    Cl = segmap_nchw.shape[1]
    nh = w1.shape[-1]
    HW = H * W

    seg_up = _nearest_resize_nchw(segmap_nchw, H, W)

    # Channels-first flattened layout: H*W on the lane dimension (layout plumbing only).
    x_cf = x_nchw.reshape(N, Cn, HW)
    seg_cf = seg_up.reshape(N, Cl, HW)
    masks = _border_masks(H, W)

    # Pack conv weights for the fused transposed GEMMs (bf16 MXU operands, f32 biases).
    w1_t = jnp.transpose(w1, (2, 0, 1)).reshape(nh, 9 * Cl).astype(jnp.bfloat16)
    b1_c = b1.reshape(nh, 1).astype(jnp.float32)
    w_cat = jnp.concatenate([wg, wb], axis=2)                                 # (9, nh, 2*Cn)
    wgb_t = jnp.transpose(w_cat, (2, 0, 1)).reshape(2 * Cn, 9 * nh).astype(jnp.bfloat16)
    bgb_c = jnp.concatenate([bg, bb], axis=1).reshape(2 * Cn, 1).astype(jnp.float32)

    # TODO(synk): for production SPADE sizes (e.g. 256x256, norm_nc>=512) add H-strip
    # tiling with a 1-row halo (grid=(N, H//TILE_H)) and raise vmem_limit_bytes so the
    # per-step residents fit v7x's 64 MiB VMEM; whole-image blocks are fine at test size.
    kernel = pl.pallas_call(
        functools.partial(spade_kernel, img_w=W),
        out_shape=jax.ShapeDtypeStruct((N, Cn, HW), x_nchw.dtype),
        grid=(N,),
        in_specs=[
            pl.BlockSpec((1, Cn, HW), lambda n: (n, 0, 0)),    # x (channels-first, flat)
            pl.BlockSpec((1, Cl, HW), lambda n: (n, 0, 0)),    # resized segmap
            pl.BlockSpec((9, HW), lambda n: (0, 0)),           # tap border masks
            pl.BlockSpec((nh, 9 * Cl), lambda n: (0, 0)),      # w_shared^T   (bf16)
            pl.BlockSpec((nh, 1), lambda n: (0, 0)),           # b_shared
            pl.BlockSpec((2 * Cn, 9 * nh), lambda n: (0, 0)),  # [w_gamma|w_beta]^T (bf16)
            pl.BlockSpec((2 * Cn, 1), lambda n: (0, 0)),       # [b_gamma|b_beta]
        ],
        out_specs=pl.BlockSpec((1, Cn, HW), lambda n: (n, 0, 0)),
        compiler_params=pltpu.CompilerParams(
            dimension_semantics=("parallel",)),  # batches independent -> both v7x TCs
    )
    out_cf = kernel(x_cf, seg_cf, masks, w1_t, b1_c, wgb_t, bgb_c)
    return out_cf.reshape(N, Cn, H, W)


# ---------------- pure-JAX reference (f32) for correctness check ----------------
def spade_ref(x, segmap, w1, b1, wg, bg, wb, bb):
    H, W = x.shape[2], x.shape[3]
    seg_up = _nearest_resize_nchw(segmap, H, W)
    mean = jnp.mean(x, axis=(2, 3), keepdims=True)
    var = jnp.mean(jnp.square(x - mean), axis=(2, 3), keepdims=True)
    normalized = (x - mean) * jax.lax.rsqrt(var + EPS)

    def conv(inp, w, b):
        w_hwio = w.reshape(3, 3, w.shape[1], w.shape[2])
        y = jax.lax.conv_general_dilated(
            inp, w_hwio, (1, 1), 'SAME',
            dimension_numbers=('NCHW', 'HWIO', 'NCHW'))
        return y + b.reshape(1, -1, 1, 1)

    actv = jnp.maximum(conv(seg_up, w1, b1), 0.0)
    gamma = conv(actv, wg, bg)
    beta = conv(actv, wb, bb)
    return normalized * (1.0 + gamma) + beta


if __name__ == "__main__":
    # Small shapes consistent with the module: batch=2, norm_nc=4, label_nc=3,
    # x spatial 16x16, segmap 8x8 (nearest-upsampled to 16x16), nhidden=128.
    N, Cn, Cl, H, W = 2, 4, 3, 16, 16
    Hs, Ws = 8, 8
    nh = 128

    key = jax.random.PRNGKey(0)
    k = jax.random.split(key, 8)

    x = jax.random.normal(k[0], (N, Cn, H, W), jnp.float32)          # NCHW (PyTorch layout)
    segmap = jax.random.normal(k[1], (N, Cl, Hs, Ws), jnp.float32)   # NCHW

    # Deterministic synthetic conv parameters (kaiming-uniform-like scale).
    def init_w(kk, cin, cout):
        bound = 1.0 / np.sqrt(cin * 9)
        return jax.random.uniform(kk, (9, cin, cout), jnp.float32, -bound, bound)

    def init_b(kk, cin, cout):
        bound = 1.0 / np.sqrt(cin * 9)
        return jax.random.uniform(kk, (1, cout), jnp.float32, -bound, bound)

    w1 = init_w(k[2], Cl, nh); b1 = init_b(k[3], Cl, nh)
    wg = init_w(k[4], nh, Cn); bg = init_b(k[5], nh, Cn)
    wb = init_w(k[6], nh, Cn); bb = init_b(k[7], nh, Cn)

    out = jax.block_until_ready(spade_forward(x, segmap, w1, b1, wg, bg, wb, bb))
    ref = jax.block_until_ready(spade_ref(x, segmap, w1, b1, wg, bg, wb, bb))

    # bf16 MXU operands with f32 accumulation -> slightly looser tolerance than pure f32.
    np.testing.assert_allclose(np.asarray(out), np.asarray(ref), rtol=3e-2, atol=3e-2)

    print("KERNEL_OK")
</pallas_src>

<mosaic_0001>
module attributes {stable_mosaic.version = 11 : i64} {
  func.func @spade_kernel(%arg0: i32, %arg1: memref<1x4x256xf32, #tpu.memory_space<vmem>>, %arg2: memref<1x3x256xf32, #tpu.memory_space<vmem>>, %arg3: memref<9x256xf32, #tpu.memory_space<vmem>>, %arg4: memref<128x27xbf16, #tpu.memory_space<vmem>>, %arg5: memref<128x1xf32, #tpu.memory_space<vmem>>, %arg6: memref<8x1152xbf16, #tpu.memory_space<vmem>>, %arg7: memref<8x1xf32, #tpu.memory_space<vmem>>, %arg8: memref<1x4x256xf32, #tpu.memory_space<vmem>>) attributes {dimension_semantics = [#tpu.dimension_semantics<parallel>], iteration_bounds = array<i64: 2>, scalar_prefetch = 0 : i64, scratch_operands = 0 : i64, tpu.core_type = #tpu.core_type<tc>, window_params = [{transform_indices = @transform_0, window_bounds = array<i64: 1, 4, 256>}, {transform_indices = @transform_1, window_bounds = array<i64: 1, 3, 256>}, {pipeline_mode = #tpu.pipeline_mode<synchronous>, transform_indices = @transform_2, window_bounds = array<i64: 9, 256>}, {pipeline_mode = #tpu.pipeline_mode<synchronous>, transform_indices = @transform_3, window_bounds = array<i64: 128, 27>}, {pipeline_mode = #tpu.pipeline_mode<synchronous>, transform_indices = @transform_4, window_bounds = array<i64: 128, 1>}, {pipeline_mode = #tpu.pipeline_mode<synchronous>, transform_indices = @transform_5, window_bounds = array<i64: 8, 1152>}, {pipeline_mode = #tpu.pipeline_mode<synchronous>, transform_indices = @transform_6, window_bounds = array<i64: 8, 1>}, {transform_indices = @transform_7, window_bounds = array<i64: 1, 4, 256>}]} {
    %c0 = arith.constant 0 : index
    %c0_0 = arith.constant 0 : index
    %c0_1 = arith.constant 0 : index
    %0 = vector.load %arg1[%c0, %c0_0, %c0_1] : memref<1x4x256xf32, #tpu.memory_space<vmem>>, vector<1x4x256xf32>
    %1 = vector.shape_cast %0 : vector<1x4x256xf32> to vector<4x256xf32>
    %cst = arith.constant dense<0.000000e+00> : vector<4xf32>
    %2 = vector.multi_reduction <add>, %1, %cst [1] : vector<4x256xf32> to vector<4xf32>
    %3 = vector.shape_cast %2 : vector<4xf32> to vector<4x1xf32>
    %cst_2 = arith.constant 2.560000e+02 : f32
    %4 = vector.broadcast %cst_2 : f32 to vector<4x1xf32>
    %5 = arith.divf %3, %4 : vector<4x1xf32>
    %6 = vector.broadcast %5 : vector<4x1xf32> to vector<4x256xf32>
    %7 = arith.subf %1, %6 : vector<4x256xf32>
    %8 = arith.mulf %7, %7 : vector<4x256xf32>
    %cst_3 = arith.constant dense<0.000000e+00> : vector<4xf32>
    %9 = vector.multi_reduction <add>, %8, %cst_3 [1] : vector<4x256xf32> to vector<4xf32>
    %10 = vector.shape_cast %9 : vector<4xf32> to vector<4x1xf32>
    %cst_4 = arith.constant 2.560000e+02 : f32
    %11 = vector.broadcast %cst_4 : f32 to vector<4x1xf32>
    %12 = arith.divf %10, %11 : vector<4x1xf32>
    %13 = vector.broadcast %5 : vector<4x1xf32> to vector<4x256xf32>
    %14 = arith.subf %1, %13 : vector<4x256xf32>
    %cst_5 = arith.constant 9.99999974E-6 : f32
    %15 = vector.broadcast %cst_5 : f32 to vector<4x1xf32>
    %16 = arith.addf %12, %15 : vector<4x1xf32>
    %17 = math.rsqrt %16 : vector<4x1xf32>
    %18 = vector.broadcast %17 : vector<4x1xf32> to vector<4x256xf32>
    %19 = arith.mulf %14, %18 : vector<4x256xf32>
    %c0_6 = arith.constant 0 : index
    %c0_7 = arith.constant 0 : index
    %c0_8 = arith.constant 0 : index
    %20 = vector.load %arg2[%c0_6, %c0_7, %c0_8] : memref<1x3x256xf32, #tpu.memory_space<vmem>>, vector<1x3x256xf32>
    %21 = vector.shape_cast %20 : vector<1x3x256xf32> to vector<3x256xf32>
    %c17_i32 = arith.constant 17 : i32
    %22 = tpu.dynamic_rotate %21 by %c17_i32 dim 1 : vector<3x256xf32>, i32 -> vector<3x256xf32>
    %c0_9 = arith.constant 0 : index
    %c0_10 = arith.constant 0 : index
    %23 = vector.load %arg3[%c0_9, %c0_10] : memref<9x256xf32, #tpu.memory_space<vmem>>, vector<1x256xf32>
    %24 = vector.broadcast %23 : vector<1x256xf32> to vector<3x256xf32>
    %25 = arith.mulf %22, %24 : vector<3x256xf32>
    %c16_i32 = arith.constant 16 : i32
    %26 = tpu.dynamic_rotate %21 by %c16_i32 dim 1 : vector<3x256xf32>, i32 -> vector<3x256xf32>
    %c1 = arith.constant 1 : index
    %c0_11 = arith.constant 0 : index
    %27 = vector.load %arg3[%c1, %c0_11] : memref<9x256xf32, #tpu.memory_space<vmem>>, vector<1x256xf32>
    %28 = vector.broadcast %27 : vector<1x256xf32> to vector<3x256xf32>
    %29 = arith.mulf %26, %28 : vector<3x256xf32>
    %c15_i32 = arith.constant 15 : i32
    %30 = tpu.dynamic_rotate %21 by %c15_i32 dim 1 : vector<3x256xf32>, i32 -> vector<3x256xf32>
    %c2 = arith.constant 2 : index
    %c0_12 = arith.constant 0 : index
    %31 = vector.load %arg3[%c2, %c0_12] : memref<9x256xf32, #tpu.memory_space<vmem>>, vector<1x256xf32>
    %32 = vector.broadcast %31 : vector<1x256xf32> to vector<3x256xf32>
    %33 = arith.mulf %30, %32 : vector<3x256xf32>
    %c1_i32 = arith.constant 1 : i32
    %34 = tpu.dynamic_rotate %21 by %c1_i32 dim 1 : vector<3x256xf32>, i32 -> vector<3x256xf32>
    %c3 = arith.constant 3 : index
    %c0_13 = arith.constant 0 : index
    %35 = vector.load %arg3[%c3, %c0_13] : memref<9x256xf32, #tpu.memory_space<vmem>>, vector<1x256xf32>
    %36 = vector.broadcast %35 : vector<1x256xf32> to vector<3x256xf32>
    %37 = arith.mulf %34, %36 : vector<3x256xf32>
    %c4 = arith.constant 4 : index
    %c0_14 = arith.constant 0 : index
    %38 = vector.load %arg3[%c4, %c0_14] : memref<9x256xf32, #tpu.memory_space<vmem>>, vector<1x256xf32>
    %39 = vector.broadcast %38 : vector<1x256xf32> to vector<3x256xf32>
    %40 = arith.mulf %21, %39 : vector<3x256xf32>
    %c255_i32 = arith.constant 255 : i32
    %41 = tpu.dynamic_rotate %21 by %c255_i32 dim 1 : vector<3x256xf32>, i32 -> vector<3x256xf32>
    %c5 = arith.constant 5 : index
    %c0_15 = arith.constant 0 : index
    %42 = vector.load %arg3[%c5, %c0_15] : memref<9x256xf32, #tpu.memory_space<vmem>>, vector<1x256xf32>
    %43 = vector.broadcast %42 : vector<1x256xf32> to vector<3x256xf32>
    %44 = arith.mulf %41, %43 : vector<3x256xf32>
    %c241_i32 = arith.constant 241 : i32
    %45 = tpu.dynamic_rotate %21 by %c241_i32 dim 1 : vector<3x256xf32>, i32 -> vector<3x256xf32>
    %c6 = arith.constant 6 : index
    %c0_16 = arith.constant 0 : index
    %46 = vector.load %arg3[%c6, %c0_16] : memref<9x256xf32, #tpu.memory_space<vmem>>, vector<1x256xf32>
    %47 = vector.broadcast %46 : vector<1x256xf32> to vector<3x256xf32>
    %48 = arith.mulf %45, %47 : vector<3x256xf32>
    %c240_i32 = arith.constant 240 : i32
    %49 = tpu.dynamic_rotate %21 by %c240_i32 dim 1 : vector<3x256xf32>, i32 -> vector<3x256xf32>
    %c7 = arith.constant 7 : index
    %c0_17 = arith.constant 0 : index
    %50 = vector.load %arg3[%c7, %c0_17] : memref<9x256xf32, #tpu.memory_space<vmem>>, vector<1x256xf32>
    %51 = vector.broadcast %50 : vector<1x256xf32> to vector<3x256xf32>
    %52 = arith.mulf %49, %51 : vector<3x256xf32>
    %c239_i32 = arith.constant 239 : i32
    %53 = tpu.dynamic_rotate %21 by %c239_i32 dim 1 : vector<3x256xf32>, i32 -> vector<3x256xf32>
    %c8 = arith.constant 8 : index
    %c0_18 = arith.constant 0 : index
    %54 = vector.load %arg3[%c8, %c0_18] : memref<9x256xf32, #tpu.memory_space<vmem>>, vector<1x256xf32>
    %55 = vector.broadcast %54 : vector<1x256xf32> to vector<3x256xf32>
    %56 = arith.mulf %53, %55 : vector<3x256xf32>
    %57 = tpu.concatenate %25, %29, %33, %37, %40, %44, %48, %52, %56 in 0 : vector<3x256xf32>, vector<3x256xf32>, vector<3x256xf32>, vector<3x256xf32>, vector<3x256xf32>, vector<3x256xf32>, vector<3x256xf32>, vector<3x256xf32>, vector<3x256xf32> -> vector<27x256xf32>
    %58 = arith.truncf %57 : vector<27x256xf32> to vector<27x256xbf16>
    %c0_19 = arith.constant 0 : index
    %c0_20 = arith.constant 0 : index
    %59 = vector.load %arg4[%c0_19, %c0_20] : memref<128x27xbf16, #tpu.memory_space<vmem>>, vector<128x27xbf16>
    %cst_21 = arith.constant dense<0.000000e+00> : vector<128x256xf32>
    %60 = tpu.matmul %59, %58, %cst_21 {dimension_numbers = #tpu.dot_dimension_numbers<[1], [0], [0], [1], [0, 0, 1, 1], [], []>} : vector<128x27xbf16>, vector<27x256xbf16>, vector<128x256xf32> -> vector<128x256xf32>
    %c0_22 = arith.constant 0 : index
    %c0_23 = arith.constant 0 : index
    %61 = vector.load %arg5[%c0_22, %c0_23] : memref<128x1xf32, #tpu.memory_space<vmem>>, vector<128x1xf32>
    %62 = vector.broadcast %61 : vector<128x1xf32> to vector<128x256xf32>
    %63 = arith.addf %60, %62 : vector<128x256xf32>
    %cst_24 = arith.constant 0.000000e+00 : f32
    %64 = vector.broadcast %cst_24 : f32 to vector<128x256xf32>
    %65 = arith.maximumf %63, %64 : vector<128x256xf32>
    %c17_i32_25 = arith.constant 17 : i32
    %66 = tpu.dynamic_rotate %65 by %c17_i32_25 dim 1 : vector<128x256xf32>, i32 -> vector<128x256xf32>
    %c0_26 = arith.constant 0 : index
    %c0_27 = arith.constant 0 : index
    %67 = vector.load %arg3[%c0_26, %c0_27] : memref<9x256xf32, #tpu.memory_space<vmem>>, vector<1x256xf32>
    %68 = vector.broadcast %67 : vector<1x256xf32> to vector<128x256xf32>
    %69 = arith.mulf %66, %68 : vector<128x256xf32>
    %c16_i32_28 = arith.constant 16 : i32
    %70 = tpu.dynamic_rotate %65 by %c16_i32_28 dim 1 : vector<128x256xf32>, i32 -> vector<128x256xf32>
    %c1_29 = arith.constant 1 : index
    %c0_30 = arith.constant 0 : index
    %71 = vector.load %arg3[%c1_29, %c0_30] : memref<9x256xf32, #tpu.memory_space<vmem>>, vector<1x256xf32>
    %72 = vector.broadcast %71 : vector<1x256xf32> to vector<128x256xf32>
    %73 = arith.mulf %70, %72 : vector<128x256xf32>
    %c15_i32_31 = arith.constant 15 : i32
    %74 = tpu.dynamic_rotate %65 by %c15_i32_31 dim 1 : vector<128x256xf32>, i32 -> vector<128x256xf32>
    %c2_32 = arith.constant 2 : index
    %c0_33 = arith.constant 0 : index
    %75 = vector.load %arg3[%c2_32, %c0_33] : memref<9x256xf32, #tpu.memory_space<vmem>>, vector<1x256xf32>
    %76 = vector.broadcast %75 : vector<1x256xf32> to vector<128x256xf32>
    %77 = arith.mulf %74, %76 : vector<128x256xf32>
    %c1_i32_34 = arith.constant 1 : i32
    %78 = tpu.dynamic_rotate %65 by %c1_i32_34 dim 1 : vector<128x256xf32>, i32 -> vector<128x256xf32>
    %c3_35 = arith.constant 3 : index
    %c0_36 = arith.constant 0 : index
    %79 = vector.load %arg3[%c3_35, %c0_36] : memref<9x256xf32, #tpu.memory_space<vmem>>, vector<1x256xf32>
    %80 = vector.broadcast %79 : vector<1x256xf32> to vector<128x256xf32>
    %81 = arith.mulf %78, %80 : vector<128x256xf32>
    %c4_37 = arith.constant 4 : index
    %c0_38 = arith.constant 0 : index
    %82 = vector.load %arg3[%c4_37, %c0_38] : memref<9x256xf32, #tpu.memory_space<vmem>>, vector<1x256xf32>
    %83 = vector.broadcast %82 : vector<1x256xf32> to vector<128x256xf32>
    %84 = arith.mulf %65, %83 : vector<128x256xf32>
    %c255_i32_39 = arith.constant 255 : i32
    %85 = tpu.dynamic_rotate %65 by %c255_i32_39 dim 1 : vector<128x256xf32>, i32 -> vector<128x256xf32>
    %c5_40 = arith.constant 5 : index
    %c0_41 = arith.constant 0 : index
    %86 = vector.load %arg3[%c5_40, %c0_41] : memref<9x256xf32, #tpu.memory_space<vmem>>, vector<1x256xf32>
    %87 = vector.broadcast %86 : vector<1x256xf32> to vector<128x256xf32>
    %88 = arith.mulf %85, %87 : vector<128x256xf32>
    %c241_i32_42 = arith.constant 241 : i32
    %89 = tpu.dynamic_rotate %65 by %c241_i32_42 dim 1 : vector<128x256xf32>, i32 -> vector<128x256xf32>
    %c6_43 = arith.constant 6 : index
    %c0_44 = arith.constant 0 : index
    %90 = vector.load %arg3[%c6_43, %c0_44] : memref<9x256xf32, #tpu.memory_space<vmem>>, vector<1x256xf32>
    %91 = vector.broadcast %90 : vector<1x256xf32> to vector<128x256xf32>
    %92 = arith.mulf %89, %91 : vector<128x256xf32>
    %c240_i32_45 = arith.constant 240 : i32
    %93 = tpu.dynamic_rotate %65 by %c240_i32_45 dim 1 : vector<128x256xf32>, i32 -> vector<128x256xf32>
    %c7_46 = arith.constant 7 : index
    %c0_47 = arith.constant 0 : index
    %94 = vector.load %arg3[%c7_46, %c0_47] : memref<9x256xf32, #tpu.memory_space<vmem>>, vector<1x256xf32>
    %95 = vector.broadcast %94 : vector<1x256xf32> to vector<128x256xf32>
    %96 = arith.mulf %93, %95 : vector<128x256xf32>
    %c239_i32_48 = arith.constant 239 : i32
    %97 = tpu.dynamic_rotate %65 by %c239_i32_48 dim 1 : vector<128x256xf32>, i32 -> vector<128x256xf32>
    %c8_49 = arith.constant 8 : index
    %c0_50 = arith.constant 0 : index
    %98 = vector.load %arg3[%c8_49, %c0_50] : memref<9x256xf32, #tpu.memory_space<vmem>>, vector<1x256xf32>
    %99 = vector.broadcast %98 : vector<1x256xf32> to vector<128x256xf32>
    %100 = arith.mulf %97, %99 : vector<128x256xf32>
    %101 = tpu.concatenate %69, %73, %77, %81, %84, %88, %92, %96, %100 in 0 : vector<128x256xf32>, vector<128x256xf32>, vector<128x256xf32>, vector<128x256xf32>, vector<128x256xf32>, vector<128x256xf32>, vector<128x256xf32>, vector<128x256xf32>, vector<128x256xf32> -> vector<1152x256xf32>
    %102 = arith.truncf %101 : vector<1152x256xf32> to vector<1152x256xbf16>
    %c0_51 = arith.constant 0 : index
    %c0_52 = arith.constant 0 : index
    %103 = vector.load %arg6[%c0_51, %c0_52] : memref<8x1152xbf16, #tpu.memory_space<vmem>>, vector<8x1152xbf16>
    %cst_53 = arith.constant dense<0.000000e+00> : vector<8x256xf32>
    %104 = tpu.matmul %103, %102, %cst_53 {dimension_numbers = #tpu.dot_dimension_numbers<[1], [0], [0], [1], [0, 0, 1, 1], [], []>} : vector<8x1152xbf16>, vector<1152x256xbf16>, vector<8x256xf32> -> vector<8x256xf32>
    %c0_54 = arith.constant 0 : index
    %c0_55 = arith.constant 0 : index
    %105 = vector.load %arg7[%c0_54, %c0_55] : memref<8x1xf32, #tpu.memory_space<vmem>>, vector<8x1xf32>
    %106 = vector.broadcast %105 : vector<8x1xf32> to vector<8x256xf32>
    %107 = arith.addf %104, %106 : vector<8x256xf32>
    %108 = vector.extract_strided_slice %107 {offsets = [0, 0], sizes = [4, 256], strides = [1, 1]} : vector<8x256xf32> to vector<4x256xf32>
    %109 = vector.extract_strided_slice %107 {offsets = [4, 0], sizes = [4, 256], strides = [1, 1]} : vector<8x256xf32> to vector<4x256xf32>
    %cst_56 = arith.constant 1.000000e+00 : f32
    %110 = vector.broadcast %cst_56 : f32 to vector<4x256xf32>
    %111 = arith.addf %110, %108 : vector<4x256xf32>
    %112 = arith.mulf %19, %111 : vector<4x256xf32>
    %113 = arith.addf %112, %109 : vector<4x256xf32>
    %c0_57 = arith.constant 0 : index
    %c0_58 = arith.constant 0 : index
    %c0_59 = arith.constant 0 : index
    %114 = vector.load %arg8[%c0_57, %c0_58, %c0_59] : memref<1x4x256xf32, #tpu.memory_space<vmem>>, vector<1x4x256xf32>
    %115 = vector.shape_cast %114 : vector<1x4x256xf32> to vector<4x256xf32>
    %116 = vector.shape_cast %113 : vector<4x256xf32> to vector<1x4x256xf32>
    tpu.vector_store %arg8[%c0_57, %c0_58, %c0_59], %116 {strides = array<i32>} : memref<1x4x256xf32, #tpu.memory_space<vmem>>, vector<1x4x256xf32>,
    return
  }
  func.func @transform_0(%arg0: i32) -> (i32, i32, i32) {
    %c0_i32 = arith.constant 0 : i32
    %c0_i32_0 = arith.constant 0 : i32
    %c0_i32_1 = arith.constant 0 : i32
    return %arg0, %c0_i32, %c0_i32_0 : i32, i32, i32
  }
  func.func @transform_1(%arg0: i32) -> (i32, i32, i32) {
    %c0_i32 = arith.constant 0 : i32
    %c0_i32_0 = arith.constant 0 : i32
    %c0_i32_1 = arith.constant 0 : i32
    return %arg0, %c0_i32, %c0_i32_0 : i32, i32, i32
  }
  func.func @transform_2(%arg0: i32) -> (i32, i32) {
    %c0_i32 = arith.constant 0 : i32
    %c0_i32_0 = arith.constant 0 : i32
    %c0_i32_1 = arith.constant 0 : i32
    return %c0_i32, %c0_i32_0 : i32, i32
  }
  func.func @transform_3(%arg0: i32) -> (i32, i32) {
    %c0_i32 = arith.constant 0 : i32
    %c0_i32_0 = arith.constant 0 : i32
    %c0_i32_1 = arith.constant 0 : i32
    return %c0_i32, %c0_i32_0 : i32, i32
  }
  func.func @transform_4(%arg0: i32) -> (i32, i32) {
    %c0_i32 = arith.constant 0 : i32
    %c0_i32_0 = arith.constant 0 : i32
    %c0_i32_1 = arith.constant 0 : i32
    return %c0_i32, %c0_i32_0 : i32, i32
  }
  func.func @transform_5(%arg0: i32) -> (i32, i32) {
    %c0_i32 = arith.constant 0 : i32
    %c0_i32_0 = arith.constant 0 : i32
    %c0_i32_1 = arith.constant 0 : i32
    return %c0_i32, %c0_i32_0 : i32, i32
  }
  func.func @transform_6(%arg0: i32) -> (i32, i32) {
    %c0_i32 = arith.constant 0 : i32
    %c0_i32_0 = arith.constant 0 : i32
    %c0_i32_1 = arith.constant 0 : i32
    return %c0_i32, %c0_i32_0 : i32, i32
  }
  func.func @transform_7(%arg0: i32) -> (i32, i32, i32) {
    %c0_i32 = arith.constant 0 : i32
    %c0_i32_0 = arith.constant 0 : i32
    %c0_i32_1 = arith.constant 0 : i32
    return %arg0, %c0_i32, %c0_i32_0 : i32, i32, i32
  }
}

</mosaic_0001>

<llo_original>
// kernel: tpu_custom_call.1
$region0: #{tpu_custom_call.1}
  #allocation0 [shape = 'u32[]', space=smem, size = 0x4, offset = 0x4, fixed_abs, tag = 'smem constant byte address 0x4 - core index']
  #allocation1 [shape = 'u32[144,128]{1,0:T(1,128)}', space=vmem, size = 0x12000, scoped, tag = 'internal scratch']
  %s0 = inlined_call_operand.vmem [shape: f32[2,4,256], index: 0, kind: input, shape index: {}]
  %s1 = inlined_call_operand.vmem [shape: f32[2,3,256], index: 1, kind: input, shape index: {}]
  %s2 = inlined_call_operand.vmem [shape: f32[9,256], index: 2, kind: input, shape index: {}]
  %s3 = inlined_call_operand.vmem [shape: bf16[128,27], index: 3, kind: input, shape index: {}]
  %s4 = inlined_call_operand.vmem [shape: f32[128,1], index: 4, kind: input, shape index: {}]
  %s5 = inlined_call_operand.vmem [shape: bf16[8,1152], index: 5, kind: input, shape index: {}]
  %s6 = inlined_call_operand.vmem [shape: f32[8,1], index: 6, kind: input, shape index: {}]
  %s7 = inlined_call_operand.hbm [shape: f32[2,4,256], index: 7, kind: output, shape index: {}]
  %s8 = sld [smem:[#allocation0]]
  $region61: #{tpu_custom_call.1} parent=0
    _
  %s10 = ssub.s32 1, %s8
  %s11 = scalar_select 0, %s10, %s8
  $region1: #{tpu_custom_call.1} parent=0
    #allocation2 [shape = 'u8[8192]{0}', space=vmem, size = 0x2000, scoped, tag = 'output window, operand 0']
    #allocation3 [shape = 's32[2]{0}', space=sflag, size = 0x8, scoped, tag = 'scoped memory for tpu_custom_call.1']
    %12 = vsyncpa [#allocation3], 0
    %s13 = scalar_lea.sflag [#allocation3], 1
    %14 = vsyncpa %s13, 0
    loop: start=0, step=1, limit=4
    $region2: #{tpu_custom_call.1} parent=1 // loop_pre_header
      _
    $region3: #{tpu_custom_call.1} parent=1 // loop_header
      %s16 = sphi 0, %s20
      %p17 = scmp.ge.s32.totalorder %s16, 4
      %s26 = sphi 0, %s28
      %s29 = sphi 0, %s26
      %s30 = sphi 0, %s29
      %s46 = sphi 0, %s30
      %s52 = sphi 0, %s54
      %s55 = sphi 0, %s52
      %s56 = sphi 0, %s55
      %s72 = sphi 0, %s56
      %s76 = sphi 0, %s76
      %s78 = sphi 0, %s76
      %s79 = sphi 0, %s78
      %s93 = sphi 0, %s79
      %s97 = sphi 0, %s97
      %s99 = sphi 0, %s97
      %s100 = sphi 0, %s99
      %s114 = sphi 0, %s100
      %s118 = sphi 0, %s118
      %s120 = sphi 0, %s118
      %s121 = sphi 0, %s120
      %s135 = sphi 0, %s121
      %s139 = sphi 0, %s139
      %s141 = sphi 0, %s139
      %s142 = sphi 0, %s141
      %s156 = sphi 0, %s142
      %s160 = sphi 0, %s160
      %s162 = sphi 0, %s160
      %s163 = sphi 0, %s162
      %s177 = sphi 0, %s163
      %s183 = sphi 0, %s185
      %s186 = sphi 0, %s183
      %s187 = sphi 0, %s186
      %s203 = sphi 0, %s187
    $region4: #{tpu_custom_call.1} parent=1 // loop_header_branch
      %19 = sbr.rel (%p17) target = $region8
    $region5: #{tpu_custom_call.1} parent=1 // loop_body
      %s21 = ssub.s32 %s16, 1
      %s22 = ssub.s32 %s16, 2
      %s23 = sadd.s32 %s16, 1
      %s24 = ssub.s32 %s16, %s23
      %p25 = scmp.eq.s32.totalorder %s24, 0
      %s27 = sadd.s32 %s26, 1
      %s28 = scalar_select %p25, %s26, %s27
      %p31 = pneg %p25
      %p32 = scmp.eq.s32.totalorder %s16, 1
      %p33 = por %p31, %p32
      %p34 = scmp.ne.s32.totalorder %s26, %s29
      %p35 = scmp.eq.s32.totalorder %s16, 0
      %p36 = por %p34, %p35
      %p37 = scmp.ne.s32.totalorder %s26, %s29
      %p38 = scmp.eq.s32.totalorder %s21, 1
      %p39 = por %p37, %p38
      %p40 = scmp.ne.s32.totalorder %s29, %s30
      %p41 = scmp.eq.s32.totalorder %s21, 0
      %p42 = por %p40, %p41
      %p43 = scmp.ne.s32.totalorder %s29, %s30
      %p44 = scmp.eq.s32.totalorder %s22, 1
      %p45 = por %p43, %p44
      %p47 = scmp.ne.s32.totalorder %s30, %s46
      %p48 = scmp.eq.s32.totalorder %s22, 0
      %p49 = por %p47, %p48
      %s50 = ssub.s32 %s16, %s23
      %p51 = scmp.eq.s32.totalorder %s50, 0
      %s53 = sadd.s32 %s52, 1
      %s54 = scalar_select %p51, %s52, %s53
      %p57 = pneg %p51
      %p58 = scmp.eq.s32.totalorder %s16, 1
      %p59 = por %p57, %p58
      %p60 = scmp.ne.s32.totalorder %s52, %s55
      %p61 = scmp.eq.s32.totalorder %s16, 0
      %p62 = por %p60, %p61
      %p63 = scmp.ne.s32.totalorder %s52, %s55
      %p64 = scmp.eq.s32.totalorder %s21, 1
      %p65 = por %p63, %p64
      %p66 = scmp.ne.s32.totalorder %s55, %s56
      %p67 = scmp.eq.s32.totalorder %s21, 0
      %p68 = por %p66, %p67
      %p69 = scmp.ne.s32.totalorder %s55, %s56
      %p70 = scmp.eq.s32.totalorder %s22, 1
      %p71 = por %p69, %p70
      %p73 = scmp.ne.s32.totalorder %s56, %s72
      %p74 = scmp.eq.s32.totalorder %s22, 0
      %p75 = por %p73, %p74
      %s77 = sadd.s32 %s76, 1
      %p80 = scmp.eq.s32.totalorder %s16, 1
      %p81 = scmp.ne.s32.totalorder %s76, %s78
      %p82 = scmp.eq.s32.totalorder %s16, 0
      %p83 = por %p81, %p82
      %p84 = scmp.ne.s32.totalorder %s76, %s78
      %p85 = scmp.eq.s32.totalorder %s21, 1
      %p86 = por %p84, %p85
      %p87 = scmp.ne.s32.totalorder %s78, %s79
      %p88 = scmp.eq.s32.totalorder %s21, 0
      %p89 = por %p87, %p88
      %p90 = scmp.ne.s32.totalorder %s78, %s79
      %p91 = scmp.eq.s32.totalorder %s22, 1
      %p92 = por %p90, %p91
      %p94 = scmp.ne.s32.totalorder %s79, %s93
      %p95 = scmp.eq.s32.totalorder %s22, 0
      %p96 = por %p94, %p95
      %s98 = sadd.s32 %s97, 1
      %p101 = scmp.eq.s32.totalorder %s16, 1
      %p102 = scmp.ne.s32.totalorder %s97, %s99
      %p103 = scmp.eq.s32.totalorder %s16, 0
      %p104 = por %p102, %p103
      %p105 = scmp.ne.s32.totalorder %s97, %s99
      %p106 = scmp.eq.s32.totalorder %s21, 1
      %p107 = por %p105, %p106
      %p108 = scmp.ne.s32.totalorder %s99, %s100
      %p109 = scmp.eq.s32.totalorder %s21, 0
      %p110 = por %p108, %p109
      %p111 = scmp.ne.s32.totalorder %s99, %s100
      %p112 = scmp.eq.s32.totalorder %s22, 1
      %p113 = por %p111, %p112
      %p115 = scmp.ne.s32.totalorder %s100, %s114
      %p116 = scmp.eq.s32.totalorder %s22, 0
      %p117 = por %p115, %p116
      %s119 = sadd.s32 %s118, 1
      %p122 = scmp.eq.s32.totalorder %s16, 1
      %p123 = scmp.ne.s32.totalorder %s118, %s120
      %p124 = scmp.eq.s32.totalorder %s16, 0
      %p125 = por %p123, %p124
      %p126 = scmp.ne.s32.totalorder %s118, %s120
      %p127 = scmp.eq.s32.totalorder %s21, 1
      %p128 = por %p126, %p127
      %p129 = scmp.ne.s32.totalorder %s120, %s121
      %p130 = scmp.eq.s32.totalorder %s21, 0
      %p131 = por %p129, %p130
      %p132 = scmp.ne.s32.totalorder %s120, %s121
      %p133 = scmp.eq.s32.totalorder %s22, 1
      %p134 = por %p132, %p133
      %p136 = scmp.ne.s32.totalorder %s121, %s135
      %p137 = scmp.eq.s32.totalorder %s22, 0
      %p138 = por %p136, %p137
      %s140 = sadd.s32 %s139, 1
      %p143 = scmp.eq.s32.totalorder %s16, 1
      %p144 = scmp.ne.s32.totalorder %s139, %s141
      %p145 = scmp.eq.s32.totalorder %s16, 0
      %p146 = por %p144, %p145
      %p147 = scmp.ne.s32.totalorder %s139, %s141
      %p148 = scmp.eq.s32.totalorder %s21, 1
      %p149 = por %p147, %p148
      %p150 = scmp.ne.s32.totalorder %s141, %s142
      %p151 = scmp.eq.s32.totalorder %s21, 0
      %p152 = por %p150, %p151
      %p153 = scmp.ne.s32.totalorder %s141, %s142
      %p154 = scmp.eq.s32.totalorder %s22, 1
      %p155 = por %p153, %p154
      %p157 = scmp.ne.s32.totalorder %s142, %s156
      %p158 = scmp.eq.s32.totalorder %s22, 0
      %p159 = por %p157, %p158
      %s161 = sadd.s32 %s160, 1
      %p164 = scmp.eq.s32.totalorder %s16, 1
      %p165 = scmp.ne.s32.totalorder %s160, %s162
      %p166 = scmp.eq.s32.totalorder %s16, 0
      %p167 = por %p165, %p166
      %p168 = scmp.ne.s32.totalorder %s160, %s162
      %p169 = scmp.eq.s32.totalorder %s21, 1
      %p170 = por %p168, %p169
      %p171 = scmp.ne.s32.totalorder %s162, %s163
      %p172 = scmp.eq.s32.totalorder %s21, 0
      %p173 = por %p171, %p172
      %p174 = scmp.ne.s32.totalorder %s162, %s163
      %p175 = scmp.eq.s32.totalorder %s22, 1
      %p176 = por %p174, %p175
      %p178 = scmp.ne.s32.totalorder %s163, %s177
      %p179 = scmp.eq.s32.totalorder %s22, 0
      %p180 = por %p178, %p179
      %s181 = ssub.s32 %s16, %s23
      %p182 = scmp.eq.s32.totalorder %s181, 0
      %s184 = sadd.s32 %s183, 1
      %s185 = scalar_select %p182, %s183, %s184
      %p188 = pneg %p182
      %p189 = scmp.eq.s32.totalorder %s16, 1
      %p190 = por %p188, %p189
      %p191 = scmp.ne.s32.totalorder %s183, %s186
      %p192 = scmp.eq.s32.totalorder %s16, 0
      %p193 = por %p191, %p192
      %p194 = scmp.ne.s32.totalorder %s183, %s186
      %p195 = scmp.eq.s32.totalorder %s21, 1
      %p196 = por %p194, %p195
      %p197 = scmp.ne.s32.totalorder %s186, %s187
      %p198 = scmp.eq.s32.totalorder %s21, 0
      %p199 = por %p197, %p198
      %p200 = scmp.ne.s32.totalorder %s186, %s187
      %p201 = scmp.eq.s32.totalorder %s22, 1
      %p202 = por %p200, %p201
      %p204 = scmp.ne.s32.totalorder %s187, %s203
      %p205 = scmp.eq.s32.totalorder %s22, 0
      %p206 = por %p204, %p205
      %p207 = scmp.le.s32.totalorder 1, %s16
      %p208 = scmp.lt.s32.totalorder %s16, 3
      %p209 = pnand %p207, %p208
      %p210 = pneg %p209
      // Predicated region
      $region9: #{tpu_custom_call.1} parent=5 // pred_check
        _
      $region10: #{tpu_custom_call.1} parent=5 // pred_check_branch
        %212 = sbr.rel (%p209) target = $region12
      $region11: #{tpu_custom_call.1} parent=5 // pred_region
        %s213 = ssub.s32 %s16, 1
        // Predicated region
        $region13: #{tpu_custom_call.1} parent=11 // pred_check
          %p214 = pneg %p89
        $region14: #{tpu_custom_call.1} parent=11 // pred_check_branch
          %216 = sbr.rel (%p214) target = $region16
        $region15: #{tpu_custom_call.1} parent=11 // pred_region
          _
        $region16: #{tpu_custom_call.1} parent=11 // pred_fallthru
          _
        // Predicated region
        $region17: #{tpu_custom_call.1} parent=11 // pred_check
          %p217 = pneg %p110
        $region18: #{tpu_custom_call.1} parent=11 // pred_check_branch
          %219 = sbr.rel (%p217) target = $region20
        $region19: #{tpu_custom_call.1} parent=11 // pred_region
          _
        $region20: #{tpu_custom_call.1} parent=11 // pred_fallthru
          _
        // Predicated region
        $region21: #{tpu_custom_call.1} parent=11 // pred_check
          %p220 = pneg %p131
        $region22: #{tpu_custom_call.1} parent=11 // pred_check_branch
          %222 = sbr.rel (%p220) target = $region24
        $region23: #{tpu_custom_call.1} parent=11 // pred_region
          _
        $region24: #{tpu_custom_call.1} parent=11 // pred_fallthru
          _
        // Predicated region
        $region25: #{tpu_custom_call.1} parent=11 // pred_check
          %p223 = pneg %p152
        $region26: #{tpu_custom_call.1} parent=11 // pred_check_branch
          %225 = sbr.rel (%p223) target = $region28
        $region27: #{tpu_custom_call.1} parent=11 // pred_region
          _
        $region28: #{tpu_custom_call.1} parent=11 // pred_fallthru
          _
        // Predicated region
        $region29: #{tpu_custom_call.1} parent=11 // pred_check
          %p226 = pneg %p173
        $region30: #{tpu_custom_call.1} parent=11 // pred_check_branch
          %228 = sbr.rel (%p226) target = $region32
        $region31: #{tpu_custom_call.1} parent=11 // pred_region
          _
        $region32: #{tpu_custom_call.1} parent=11 // pred_fallthru
          _
      $region12: #{tpu_custom_call.1} parent=5 // pred_fallthru
        _
      %p229 = scmp.lt.s32.totalorder %s16, 2
      // Predicated region
      $region33: #{tpu_custom_call.1} parent=5 // pred_check
        %p230 = pneg %p229
      $region34: #{tpu_custom_call.1} parent=5 // pred_check_branch
        %232 = sbr.rel (%p230) target = $region36
      $region35: #{tpu_custom_call.1} parent=5 // pred_region
        // Predicated region
        $region37: #{tpu_custom_call.1} parent=35 // pred_check
          %p233 = pneg %p36
        $region38: #{tpu_custom_call.1} parent=35 // pred_check_branch
          %235 = sbr.rel (%p233) target = $region40
        $region39: #{tpu_custom_call.1} parent=35 // pred_region
          %p236 = scmp.lt.s32.totalorder %s16, 1
          %s237 = scalar_select %p236, %s16, 1
          %s238 = smul.addr %s237, 2
          %s239 = smul.addr %s238, 4
          %s240 = scalar_lea.vmem %s0, %s239
        $region40: #{tpu_custom_call.1} parent=35 // pred_fallthru
          _
        // Predicated region
        $region41: #{tpu_custom_call.1} parent=35 // pred_check
          %p241 = pneg %p62
        $region42: #{tpu_custom_call.1} parent=35 // pred_check_branch
          %243 = sbr.rel (%p241) target = $region44
        $region43: #{tpu_custom_call.1} parent=35 // pred_region
          %p244 = scmp.lt.s32.totalorder %s16, 1
          %s245 = scalar_select %p244, %s16, 1
          %s246 = smul.addr %s245, 2
          %s247 = smul.addr %s246, 4
          %s248 = scalar_lea.vmem %s1, %s247
        $region44: #{tpu_custom_call.1} parent=35 // pred_fallthru
          _
      $region36: #{tpu_custom_call.1} parent=5 // pred_fallthru
        _
      %p249 = scmp.le.s32.totalorder 1, %s16
      %p250 = scmp.lt.s32.totalorder %s16, 3
      %p251 = pnand %p249, %p250
      %p252 = pneg %p251
      // Predicated region
      $region45: #{tpu_custom_call.1} parent=5 // pred_check
        _
      $region46: #{tpu_custom_call.1} parent=5 // pred_check_branch
        %254 = sbr.rel (%p251) target = $region48
      $region47: #{tpu_custom_call.1} parent=5 // pred_region
        %s255 = ssub.s32 %s16, 1
        %p256 = scmp.lt.s32.totalorder %s21, 1
        %s257 = scalar_select %p256, %s21, 1
        %s258 = smul.addr %s257, 2
        %s259 = smul.addr %s258, 4
        %s260 = scalar_lea.vmem %s0, %s259
        %p261 = pneg %p42
        %p262 = pneg %p39
        %p263 = scmp.lt.s32.totalorder %s21, 1
        %s264 = scalar_select %p263, %s21, 1
        %s265 = smul.addr %s264, 2
        %s266 = smul.addr %s265, 4
        %s267 = scalar_lea.vmem %s1, %s266
        %p268 = pneg %p68
        %p269 = pneg %p65
        %p270 = pneg %p89
        %p271 = pneg %p86
        %p272 = pneg %p110
        %p273 = pneg %p107
        %p274 = pneg %p131
        %p275 = pneg %p128
        %p276 = pneg %p152
        %p277 = pneg %p149
        %p278 = pneg %p173
        %p279 = pneg %p170
        %p280 = pneg %p199
        %p281 = pneg %p196
        %s282 = sand.u32 %s186, 1
        %s283 = scalar_lea.sflag [#allocation3], %s282
        %s284 = sand.u32 %s186, 1
        %s285 = smul.addr %s284, 8
        %s286 = scalar_lea.vmem [#allocation2], %s285
        %p287 = scmp.lt.s32.totalorder %s21, 1
        %s288 = scalar_select %p287, %s21, 1
        %s289 = smul.addr %s288, 2
        %s290 = smul.addr %s289, 4
        %s291 = scalar_lea.vmem %s0, %s290
        %p292 = scmp.lt.s32.totalorder %s21, 1
        %s293 = scalar_select %p292, %s21, 1
        %s294 = smul.addr %s293, 2
        %s295 = smul.addr %s294, 4
        %s296 = scalar_lea.vmem %s1, %s295
        %v298 = vld [vmem:[%s291] sm:$0xff]
        %v300 = vcombine.high %v298, %v298
        %vm302 = vcmask 1043456
        %v303 = vsel %vm302, %v298, 0.0
        %v304 = vsel %vm302, %v300, 0.0
        %v305 = vadd.f32 %v303, %v304
        %306 = vadd.xlane.f32.xlu0 %v305
        %v307 = vpop.xlane.xlu0 %306
        %v308 = vrcp.pop 256.0
        %v309 = vmul.f32 %v307, %v308
        %v312 = vunpack.c.l.s4 839922192
        %v313 = vunpack.c.0.s8 %v312
        %v314 = vlaneseq
        %v315 = vshrl.u32 %v314, 7
        %v316 = vsub.s32 %v313, %v315
        %v317 = vrot.slane %v309, %v316
        %v319 = vsub.f32 %v298, %v317
        %v320 = vmul.f32 %v319, %v319
        %v322 = vcombine.high %v320, %v320
        %v324 = vsel %vm302, %v320, 0.0
        %v325 = vsel %vm302, %v322, 0.0
        %v326 = vadd.f32 %v324, %v325
        %327 = vadd.xlane.f32.xlu0 %v326
        %v328 = vpop.xlane.xlu0 %327
        %v329 = vmul.f32 %v328, %v308
        %v330 = vadd.f32 %v329, 1e-05
        %v331 = vrsqrt.pop %v330
        %v334 = vunpack.c.l.s4 839922192
        %v335 = vunpack.c.0.s8 %v334
        %v336 = vlaneseq
        %v337 = vshrl.u32 %v336, 7
        %v338 = vsub.s32 %v335, %v337
        %v339 = vrot.slane %v331, %v338
        %v341 = vmul.f32 %v319, %v339
        %v342 = vld [vmem:[%s296] sm:$0x77]
        %v344 = vcombine.high %v342, %v342
        %346 = vrot.lane.b32.xlu0 %v342, 17
        %v347 = vpop.permute.xlu0 %346
        %348 = vrot.lane.b32.xlu0 %v344, 17
        %v349 = vpop.permute.xlu0 %348
        %v350 = vlaneseq
        %v351 = vand.u32 %v350, 127
        %vm352 = vcmp.lt.s32.totalorder %v351, 17
        %v353 = vsel %vm352, %v347, %v349
        %v354 = vsel %vm352, %v349, %v347
        %v355 = vld [vmem:[%s2] ss:$8 sm:$0x3]
        %v357 = vlaneseq
        %v358 = vshrl.u32 %v357, 7
        %v359 = vsub.s32 0, %v358
        %v360 = vrot.slane %v355, %v359
        %v361 = vlaneseq
        %v362 = vshrl.u32 %v361, 7
        %v363 = vsub.s32 1, %v362
        %v364 = vrot.slane %v355, %v363
        %v367 = vmul.f32 %v354, %v360
        %v368 = vmul.f32 %v353, %v364
        %369 = vrot.lane.b32.xlu0 %v342, 16
        %v370 = vpop.permute.xlu0 %369
        %371 = vrot.lane.b32.xlu0 %v344, 16
        %v372 = vpop.permute.xlu0 %371
        %vm373 = vcmp.lt.s32.totalorder %v351, 16
        %v374 = vsel %vm373, %v370, %v372
        %v375 = vsel %vm373, %v372, %v370
        %s376 = scalar_lea.vmem %s2, 1
        %v377 = vld [vmem:[%s376] ss:$8 sm:$0x3]
        %v379 = vlaneseq
        %v380 = vshrl.u32 %v379, 7
        %v381 = vsub.s32 0, %v380
        %v382 = vrot.slane %v377, %v381
        %v383 = vlaneseq
        %v384 = vshrl.u32 %v383, 7
        %v385 = vsub.s32 1, %v384
        %v386 = vrot.slane %v377, %v385
        %v389 = vmul.f32 %v375, %v382
        %v390 = vmul.f32 %v374, %v386
        %391 = vrot.lane.b32.xlu0 %v342, 15
        %v392 = vpop.permute.xlu0 %391
        %393 = vrot.lane.b32.xlu0 %v344, 15
        %v394 = vpop.permute.xlu0 %393
        %vm395 = vcmp.lt.s32.totalorder %v351, 15
        %v396 = vsel %vm395, %v392, %v394
        %v397 = vsel %vm395, %v394, %v392
        %s398 = scalar_lea.vmem %s2, 2
        %v399 = vld [vmem:[%s398] ss:$8 sm:$0x3]
        %v401 = vlaneseq
        %v402 = vshrl.u32 %v401, 7
        %v403 = vsub.s32 0, %v402
        %v404 = vrot.slane %v399, %v403
        %v405 = vlaneseq
        %v406 = vshrl.u32 %v405, 7
        %v407 = vsub.s32 1, %v406
        %v408 = vrot.slane %v399, %v407
        %v411 = vmul.f32 %v397, %v404
        %v412 = vmul.f32 %v396, %v408
        %413 = vrot.lane.b32.xlu0 %v342, 1
        %v414 = vpop.permute.xlu0 %413
        %415 = vrot.lane.b32.xlu0 %v344, 1
        %v416 = vpop.permute.xlu0 %415
        %vm417 = vcmp.lt.s32.totalorder %v351, 1
        %v418 = vsel %vm417, %v414, %v416
        %v419 = vsel %vm417, %v416, %v414
        %s420 = scalar_lea.vmem %s2, 3
        %v421 = vld [vmem:[%s420] ss:$8 sm:$0x3]
        %v423 = vlaneseq
        %v424 = vshrl.u32 %v423, 7
        %v425 = vsub.s32 0, %v424
        %v426 = vrot.slane %v421, %v425
        %v427 = vlaneseq
        %v428 = vshrl.u32 %v427, 7
        %v429 = vsub.s32 1, %v428
        %v430 = vrot.slane %v421, %v429
        %v433 = vmul.f32 %v419, %v426
        %v434 = vmul.f32 %v418, %v430
        %s435 = scalar_lea.vmem %s2, 4
        %v436 = vld [vmem:[%s435] ss:$8 sm:$0x3]
        %v438 = vlaneseq
        %v439 = vshrl.u32 %v438, 7
        %v440 = vsub.s32 0, %v439
        %v441 = vrot.slane %v436, %v440
        %v442 = vlaneseq
        %v443 = vshrl.u32 %v442, 7
        %v444 = vsub.s32 1, %v443
        %v445 = vrot.slane %v436, %v444
        %v446 = vcombine.low %v441, %v445
        %v448 = vmul.f32 %v342, %v446
        %449 = vrot.lane.b32.xlu0 %v342, 127
        %v450 = vpop.permute.xlu0 %449
        %451 = vrot.lane.b32.xlu0 %v344, 127
        %v452 = vpop.permute.xlu0 %451
        %vm453 = vcmp.lt.s32.totalorder %v351, 127
        %v454 = vsel %vm453, %v450, %v452
        %v455 = vsel %vm453, %v452, %v450
        %s456 = scalar_lea.vmem %s2, 5
        %v457 = vld [vmem:[%s456] ss:$8 sm:$0x3]
        %v459 = vlaneseq
        %v460 = vshrl.u32 %v459, 7
        %v461 = vsub.s32 0, %v460
        %v462 = vrot.slane %v457, %v461
        %v463 = vlaneseq
        %v464 = vshrl.u32 %v463, 7
        %v465 = vsub.s32 1, %v464
        %v466 = vrot.slane %v457, %v465
        %v469 = vmul.f32 %v454, %v462
        %v470 = vmul.f32 %v455, %v466
        %471 = vrot.lane.b32.xlu0 %v342, 113
        %v472 = vpop.permute.xlu0 %471
        %473 = vrot.lane.b32.xlu0 %v344, 113
        %v474 = vpop.permute.xlu0 %473
        %vm475 = vcmp.lt.s32.totalorder %v351, 113
        %v476 = vsel %vm475, %v472, %v474
        %v477 = vsel %vm475, %v474, %v472
        %s478 = scalar_lea.vmem %s2, 6
        %v479 = vld [vmem:[%s478] ss:$8 sm:$0x3]
        %v481 = vlaneseq
        %v482 = vshrl.u32 %v481, 7
        %v483 = vsub.s32 0, %v482
        %v484 = vrot.slane %v479, %v483
        %v485 = vlaneseq
        %v486 = vshrl.u32 %v485, 7
        %v487 = vsub.s32 1, %v486
        %v488 = vrot.slane %v479, %v487
        %v491 = vmul.f32 %v476, %v484
        %v492 = vmul.f32 %v477, %v488
        %493 = vrot.lane.b32.xlu0 %v342, 112
        %v494 = vpop.permute.xlu0 %493
        %495 = vrot.lane.b32.xlu0 %v344, 112
        %v496 = vpop.permute.xlu0 %495
        %vm497 = vcmp.lt.s32.totalorder %v351, 112
        %v498 = vsel %vm497, %v494, %v496
        %v499 = vsel %vm497, %v496, %v494
        %s500 = scalar_lea.vmem %s2, 7
        %v501 = vld [vmem:[%s500] ss:$8 sm:$0x3]
        %v503 = vlaneseq
        %v504 = vshrl.u32 %v503, 7
        %v505 = vsub.s32 0, %v504
        %v506 = vrot.slane %v501, %v505
        %v507 = vlaneseq
        %v508 = vshrl.u32 %v507, 7
        %v509 = vsub.s32 1, %v508
        %v510 = vrot.slane %v501, %v509
        %v513 = vmul.f32 %v498, %v506
        %v514 = vmul.f32 %v499, %v510
        %515 = vrot.lane.b32.xlu0 %v342, 111
        %v516 = vpop.permute.xlu0 %515
        %517 = vrot.lane.b32.xlu0 %v344, 111
        %v518 = vpop.permute.xlu0 %517
        %vm519 = vcmp.lt.s32.totalorder %v351, 111
        %v520 = vsel %vm519, %v516, %v518
        %v521 = vsel %vm519, %v518, %v516
        %s522 = scalar_lea.vmem %s2, 16
        %v523 = vld [vmem:[%s522] ss:$8 sm:$0x3]
        %v525 = vlaneseq
        %v526 = vshrl.u32 %v525, 7
        %v527 = vsub.s32 0, %v526
        %v528 = vrot.slane %v523, %v527
        %v529 = vlaneseq
        %v530 = vshrl.u32 %v529, 7
        %v531 = vsub.s32 1, %v530
        %v532 = vrot.slane %v523, %v531
        %v535 = vmul.f32 %v520, %v528
        %v536 = vmul.f32 %v521, %v532
        %v539 = vrot.slane %v389, 5
        %v540 = vrot.slane %v390, 5
        %v545 = vrot.slane %v411, 2
        %v546 = vrot.slane %v412, 2
        %v551 = vrot.slane %v433, 7
        %v552 = vrot.slane %v434, 7
        %v556 = vcombine.low %v448, %v448
        %v560 = vrot.slane %v469, 1
        %v561 = vrot.slane %v470, 1
        %v566 = vrot.slane %v491, 6
        %v567 = vrot.slane %v492, 6
        %v572 = vrot.slane %v513, 3
        %v573 = vrot.slane %v514, 3
        %vm576 = vcmask 1042432
        %v577 = vsel %vm576, %v367, %v539
        %v578 = vsel %vm576, %v368, %v540
        %vm579 = vcmask 1045504
        %v580 = vsel %vm579, %v577, %v545
        %v581 = vsel %vm579, %v578, %v546
        %vm582 = vcmask 1040384
        %v583 = vsel %vm582, %v545, %v551
        %v584 = vsel %vm582, %v546, %v552
        %v585 = vsel %vm302, %v583, %v556
        %v586 = vsel %vm302, %v584, %v448
        %vm587 = vcmask 1046528
        %v588 = vsel %vm587, %v585, %v560
        %v589 = vsel %vm587, %v586, %v561
        %vm590 = vcmask 1041408
        %v591 = vsel %vm590, %v560, %v566
        %v592 = vsel %vm590, %v561, %v567
        %vm593 = vcmask 1044480
        %v594 = vsel %vm593, %v591, %v572
        %v595 = vsel %vm593, %v592, %v573
        %v596 = vpack.c.bf16 %v588, %v580
        %v597 = vpack.c.bf16 %v589, %v581
        %v598 = vpack.c.bf16 %v535, %v594
        %v599 = vpack.c.bf16 %v536, %v595
        %v600 = vld [vmem:[%s3] sm:$0xf]
        %v601 = vld [vmem:[%s3 + $0x4] sm:$0xf]
        %v602 = vld [vmem:[%s3 + $0x8] sm:$0xf]
        %v603 = vld [vmem:[%s3 + $0xc] sm:$0xf]
        %v604 = vld [vmem:[%s3 + $0x10] sm:$0xf]
        %v605 = vld [vmem:[%s3 + $0x14] sm:$0xf]
        %v606 = vld [vmem:[%s3 + $0x18] sm:$0xf]
        %v607 = vld [vmem:[%s3 + $0x1c] sm:$0xf]
        %v608 = vld [vmem:[%s3 + $0x20] sm:$0xf]
        %v609 = vld [vmem:[%s3 + $0x24] sm:$0xf]
        %v610 = vld [vmem:[%s3 + $0x28] sm:$0xf]
        %v611 = vld [vmem:[%s3 + $0x2c] sm:$0xf]
        %v612 = vld [vmem:[%s3 + $0x30] sm:$0xf]
        %v613 = vld [vmem:[%s3 + $0x34] sm:$0xf]
        %v614 = vld [vmem:[%s3 + $0x38] sm:$0xf]
        %v615 = vld [vmem:[%s3 + $0x3c] sm:$0xf]
        %v616 = vld [vmem:[%s4] sm:$0xff]
        %v617 = vld [vmem:[%s4 + $0x8] sm:$0xff]
        %v618 = vld [vmem:[%s4 + $0x10] sm:$0xff]
        %v619 = vld [vmem:[%s4 + $0x18] sm:$0xff]
        %v620 = vld [vmem:[%s4 + $0x20] sm:$0xff]
        %v621 = vld [vmem:[%s4 + $0x28] sm:$0xff]
        %v622 = vld [vmem:[%s4 + $0x30] sm:$0xff]
        %v623 = vld [vmem:[%s4 + $0x38] sm:$0xff]
        %v624 = vld [vmem:[%s4 + $0x40] sm:$0xff]
        %v625 = vld [vmem:[%s4 + $0x48] sm:$0xff]
        %v626 = vld [vmem:[%s4 + $0x50] sm:$0xff]
        %v627 = vld [vmem:[%s4 + $0x58] sm:$0xff]
        %v628 = vld [vmem:[%s4 + $0x60] sm:$0xff]
        %v629 = vld [vmem:[%s4 + $0x68] sm:$0xff]
        %v630 = vld [vmem:[%s4 + $0x70] sm:$0xff]
        %v631 = vld [vmem:[%s4 + $0x78] sm:$0xff]
        %633 = vset.pattern.permute.xlu0 0
        %634 = vperm.xlu0 %633, %v616
        %v635 = vpop.permute.xlu0 %634
        %638 = vset.pattern.permute.xlu0 0
        %639 = vperm.xlu0 %638, %v617
        %v640 = vpop.permute.xlu0 %639
        %643 = vset.pattern.permute.xlu0 0
        %644 = vperm.xlu0 %643, %v618
        %v645 = vpop.permute.xlu0 %644
        %648 = vset.pattern.permute.xlu0 0
        %649 = vperm.xlu0 %648, %v619
        %v650 = vpop.permute.xlu0 %649
        %653 = vset.pattern.permute.xlu0 0
        %654 = vperm.xlu0 %653, %v620
        %v655 = vpop.permute.xlu0 %654
        %658 = vset.pattern.permute.xlu0 0
        %659 = vperm.xlu0 %658, %v621
        %v660 = vpop.permute.xlu0 %659
        %663 = vset.pattern.permute.xlu0 0
        %664 = vperm.xlu0 %663, %v622
        %v665 = vpop.permute.xlu0 %664
        %668 = vset.pattern.permute.xlu0 0
        %669 = vperm.xlu0 %668, %v623
        %v670 = vpop.permute.xlu0 %669
        %673 = vset.pattern.permute.xlu0 0
        %674 = vperm.xlu0 %673, %v624
        %v675 = vpop.permute.xlu0 %674
        %678 = vset.pattern.permute.xlu0 0
        %679 = vperm.xlu0 %678, %v625
        %v680 = vpop.permute.xlu0 %679
        %683 = vset.pattern.permute.xlu0 0
        %684 = vperm.xlu0 %683, %v626
        %v685 = vpop.permute.xlu0 %684
        %688 = vset.pattern.permute.xlu0 0
        %689 = vperm.xlu0 %688, %v627
        %v690 = vpop.permute.xlu0 %689
        %693 = vset.pattern.permute.xlu0 0
        %694 = vperm.xlu0 %693, %v628
        %v695 = vpop.permute.xlu0 %694
        %698 = vset.pattern.permute.xlu0 0
        %699 = vperm.xlu0 %698, %v629
        %v700 = vpop.permute.xlu0 %699
        %703 = vset.pattern.permute.xlu0 0
        %704 = vperm.xlu0 %703, %v630
        %v705 = vpop.permute.xlu0 %704
        %708 = vset.pattern.permute.xlu0 0
        %709 = vperm.xlu0 %708, %v631
        %v710 = vpop.permute.xlu0 %709
        %v728 = vunpack.c.l.b16 %v600
        %v729 = vunpack.c.l.b16 %v601
        %v730 = vunpack.c.l.b16 %v602
        %v731 = vunpack.c.l.b16 %v603
        %v732 = vunpack.c.l.b16 %v604
        %v733 = vunpack.c.l.b16 %v605
        %v734 = vunpack.c.l.b16 %v606
        %v735 = vunpack.c.l.b16 %v607
        %v736 = vunpack.c.l.b16 %v608
        %v737 = vunpack.c.l.b16 %v609
        %v738 = vunpack.c.l.b16 %v610
        %v739 = vunpack.c.l.b16 %v611
        %v740 = vunpack.c.l.b16 %v612
        %v741 = vunpack.c.l.b16 %v613
        %v742 = vunpack.c.l.b16 %v614
        %v743 = vunpack.c.l.b16 %v615
        %v744 = vpack.c.b16 %v729, %v728
        %v745 = vpack.c.b16 %v731, %v730
        %v746 = vpack.c.b16 %v733, %v732
        %v747 = vpack.c.b16 %v735, %v734
        %v748 = vpack.c.b16 %v737, %v736
        %v749 = vpack.c.b16 %v739, %v738
        %v750 = vpack.c.b16 %v741, %v740
        %v751 = vpack.c.b16 %v743, %v742
        %vm752 = vcmask 220160
        %v754 = vsel %vm752, %v744, 0
        %v757 = vsel %vm752, %v745, 0
        %v760 = vsel %vm752, %v746, 0
        %v763 = vsel %vm752, %v747, 0
        %v766 = vsel %vm752, %v748, 0
        %v769 = vsel %vm752, %v749, 0
        %v772 = vsel %vm752, %v750, 0
        %v775 = vsel %vm752, %v751, 0
        %v777 = vsel %vm593, 4294967295, 65535
        %v778 = vsel %vm579, %v777, 0
        %v780 = vand.u32 %v598, %v778
        %v783 = vand.u32 %v599, %v778
        %785 = vmatprep.subr.bf16.mxu0 %v597
        %786 = vmatpush1.bf16.msra.mxu0 %v596
        %787 = vmatprep.subr.bf16.mxu0 %v783
        %788 = vmatpush1.bf16.msra.mxu0 %v780
        %789 = vmatprep.subr.bf16.mxu0 0
        %790 = vmatpush1.bf16.msra.mxu0 0
        %791 = vmatprep.subr.bf16.mxu0 0
        %792 = vmatpush1.bf16.msra.mxu0 0
        %793 = vmatprep.subr.bf16.mxu0 0
        %794 = vmatpush1.bf16.msra.mxu0 0
        %795 = vmatprep.subr.bf16.mxu0 0
        %796 = vmatpush1.bf16.msra.mxu0 0
        %797 = vmatprep.subr.bf16.mxu0 0
        %798 = vmatpush1.bf16.msra.mxu0 0
        %799 = vmatprep.subr.bf16.mxu0 0
        %800 = vmatpush1.bf16.msra.mxu0 0
        %801 = vmatprep.subr.bf16.mxu0 0
        %802 = vmatpush1.bf16.msra.mxu0 0
        %803 = vmatprep.subr.bf16.mxu0 0
        %804 = vmatpush1.bf16.msra.mxu0 0
        %805 = vmatprep.subr.bf16.mxu0 0
        %806 = vmatpush1.bf16.msra.mxu0 0
        %807 = vmatprep.subr.bf16.mxu0 0
        %808 = vmatpush1.bf16.msra.mxu0 0
        %809 = vmatprep.subr.bf16.mxu0 0
        %810 = vmatpush1.bf16.msra.mxu0 0
        %811 = vmatprep.subr.bf16.mxu0 0
        %812 = vmatpush1.bf16.msra.mxu0 0
        %813 = vmatprep.subr.bf16.mxu0 0
        %814 = vmatpush1.bf16.msra.mxu0 0
        %815 = vmatprep.subr.bf16.mxu0 0
        %816 = vmatpush1.bf16.msra.mxu0 0
        %817 = vmatprep.mubr.bf16.mxu0 0
        %818 = vmatmul.mubr.bf16.gmra.mrb[0].mxu0 %v754
        %v819 = vpop.f32.mrb[0].mxu0
        %v820 = vadd.f32 %v635, %v819
        %v821 = vpop.f32.mrb[0].mxu0
        %v822 = vadd.f32 %v635, %v821
        %v823 = vpop.f32.mrb[0].mxu0
        %v824 = vadd.f32 %v640, %v823
        %v825 = vpop.f32.mrb[0].mxu0
        %v826 = vadd.f32 %v640, %v825
        %827 = vmatprep.mubr.bf16.mxu0 0
        %828 = vmatmul.mubr.bf16.gmra.mrb[0].mxu0 %v757
        %v829 = vpop.f32.mrb[0].mxu0
        %v830 = vadd.f32 %v645, %v829
        %v831 = vpop.f32.mrb[0].mxu0
        %v832 = vadd.f32 %v645, %v831
        %v833 = vpop.f32.mrb[0].mxu0
        %v834 = vadd.f32 %v650, %v833
        %v835 = vpop.f32.mrb[0].mxu0
        %v836 = vadd.f32 %v650, %v835
        %837 = vmatprep.mubr.bf16.mxu0 0
        %838 = vmatmul.mubr.bf16.gmra.mrb[0].mxu0 %v760
        %v839 = vpop.f32.mrb[0].mxu0
        %v840 = vadd.f32 %v655, %v839
        %v841 = vpop.f32.mrb[0].mxu0
        %v842 = vadd.f32 %v655, %v841
        %v843 = vpop.f32.mrb[0].mxu0
        %v844 = vadd.f32 %v660, %v843
        %v845 = vpop.f32.mrb[0].mxu0
        %v846 = vadd.f32 %v660, %v845
        %847 = vmatprep.mubr.bf16.mxu0 0
        %848 = vmatmul.mubr.bf16.gmra.mrb[0].mxu0 %v763
        %v849 = vpop.f32.mrb[0].mxu0
        %v850 = vadd.f32 %v665, %v849
        %v851 = vpop.f32.mrb[0].mxu0
        %v852 = vadd.f32 %v665, %v851
        %v853 = vpop.f32.mrb[0].mxu0
        %v854 = vadd.f32 %v670, %v853
        %v855 = vpop.f32.mrb[0].mxu0
        %v856 = vadd.f32 %v670, %v855
        %857 = vmatprep.mubr.bf16.mxu0 0
        %858 = vmatmul.mubr.bf16.gmra.mrb[0].mxu0 %v766
        %v859 = vpop.f32.mrb[0].mxu0
        %v860 = vadd.f32 %v675, %v859
        %v861 = vpop.f32.mrb[0].mxu0
        %v862 = vadd.f32 %v675, %v861
        %v863 = vpop.f32.mrb[0].mxu0
        %v864 = vadd.f32 %v680, %v863
        %v865 = vpop.f32.mrb[0].mxu0
        %v866 = vadd.f32 %v680, %v865
        %867 = vmatprep.mubr.bf16.mxu0 0
        %868 = vmatmul.mubr.bf16.gmra.mrb[0].mxu0 %v769
        %v869 = vpop.f32.mrb[0].mxu0
        %v870 = vadd.f32 %v685, %v869
        %v871 = vpop.f32.mrb[0].mxu0
        %v872 = vadd.f32 %v685, %v871
        %v873 = vpop.f32.mrb[0].mxu0
        %v874 = vadd.f32 %v690, %v873
        %v875 = vpop.f32.mrb[0].mxu0
        %v876 = vadd.f32 %v690, %v875
        %877 = vmatprep.mubr.bf16.mxu0 0
        %878 = vmatmul.mubr.bf16.gmra.mrb[0].mxu0 %v772
        %v879 = vpop.f32.mrb[0].mxu0
        %v880 = vadd.f32 %v695, %v879
        %v881 = vpop.f32.mrb[0].mxu0
        %v882 = vadd.f32 %v695, %v881
        %v883 = vpop.f32.mrb[0].mxu0
        %v884 = vadd.f32 %v700, %v883
        %v885 = vpop.f32.mrb[0].mxu0
        %v886 = vadd.f32 %v700, %v885
        %887 = vmatprep.mubr.bf16.mxu0 0
        %888 = vmatmul.mubr.bf16.gmra.mrb[0].mxu0 %v775
        %v889 = vpop.f32.mrb[0].mxu0
        %v890 = vadd.f32 %v705, %v889
        %v891 = vpop.f32.mrb[0].mxu0
        %v892 = vadd.f32 %v705, %v891
        %v893 = vpop.f32.mrb[0].mxu0
        %v894 = vadd.f32 %v710, %v893
        %v895 = vpop.f32.mrb[0].mxu0
        %v896 = vadd.f32 %v710, %v895
        %897 = vdwg.mxu0
        %v898 = vmax.f32 %v820, 0.0
        %v899 = vmax.f32 %v822, 0.0
        %v900 = vmax.f32 %v824, 0.0
        %v901 = vmax.f32 %v826, 0.0
        %v902 = vmax.f32 %v830, 0.0
        %v903 = vmax.f32 %v832, 0.0
        %v904 = vmax.f32 %v834, 0.0
        %v905 = vmax.f32 %v836, 0.0
        %v906 = vmax.f32 %v840, 0.0
        %v907 = vmax.f32 %v842, 0.0
        %v908 = vmax.f32 %v844, 0.0
        %v909 = vmax.f32 %v846, 0.0
        %v910 = vmax.f32 %v850, 0.0
        %v911 = vmax.f32 %v852, 0.0
        %v912 = vmax.f32 %v854, 0.0
        %v913 = vmax.f32 %v856, 0.0
        %v914 = vmax.f32 %v860, 0.0
        %v915 = vmax.f32 %v862, 0.0
        %v916 = vmax.f32 %v864, 0.0
        %v917 = vmax.f32 %v866, 0.0
        %v918 = vmax.f32 %v870, 0.0
        %v919 = vmax.f32 %v872, 0.0
        %v920 = vmax.f32 %v874, 0.0
        %v921 = vmax.f32 %v876, 0.0
        %v922 = vmax.f32 %v880, 0.0
        %v923 = vmax.f32 %v882, 0.0
        %v924 = vmax.f32 %v884, 0.0
        %v925 = vmax.f32 %v886, 0.0
        %v926 = vmax.f32 %v890, 0.0
        %v927 = vmax.f32 %v892, 0.0
        %v928 = vmax.f32 %v894, 0.0
        %v929 = vmax.f32 %v896, 0.0
        %930 = vrot.lane.b32.xlu0 %v898, 17
        %v931 = vpop.permute.xlu0 %930
        %932 = vrot.lane.b32.xlu0 %v900, 17
        %v933 = vpop.permute.xlu0 %932
        %934 = vrot.lane.b32.xlu0 %v902, 17
        %v935 = vpop.permute.xlu0 %934
        %936 = vrot.lane.b32.xlu0 %v904, 17
        %v937 = vpop.permute.xlu0 %936
        %938 = vrot.lane.b32.xlu0 %v906, 17
        %v939 = vpop.permute.xlu0 %938
        %940 = vrot.lane.b32.xlu0 %v908, 17
        %v941 = vpop.permute.xlu0 %940
        %942 = vrot.lane.b32.xlu0 %v910, 17
        %v943 = vpop.permute.xlu0 %942
        %944 = vrot.lane.b32.xlu0 %v912, 17
        %v945 = vpop.permute.xlu0 %944
        %946 = vrot.lane.b32.xlu0 %v914, 17
        %v947 = vpop.permute.xlu0 %946
        %948 = vrot.lane.b32.xlu0 %v916, 17
        %v949 = vpop.permute.xlu0 %948
        %950 = vrot.lane.b32.xlu0 %v918, 17
        %v951 = vpop.permute.xlu0 %950
        %952 = vrot.lane.b32.xlu0 %v920, 17
        %v953 = vpop.permute.xlu0 %952
        %954 = vrot.lane.b32.xlu0 %v922, 17
        %v955 = vpop.permute.xlu0 %954
        %956 = vrot.lane.b32.xlu0 %v924, 17
        %v957 = vpop.permute.xlu0 %956
        %958 = vrot.lane.b32.xlu0 %v926, 17
        %v959 = vpop.permute.xlu0 %958
        %960 = vrot.lane.b32.xlu0 %v928, 17
        %v961 = vpop.permute.xlu0 %960
        %962 = vrot.lane.b32.xlu0 %v899, 17
        %v963 = vpop.permute.xlu0 %962
        %964 = vrot.lane.b32.xlu0 %v901, 17
        %v965 = vpop.permute.xlu0 %964
        %966 = vrot.lane.b32.xlu0 %v903, 17
        %v967 = vpop.permute.xlu0 %966
        %968 = vrot.lane.b32.xlu0 %v905, 17
        %v969 = vpop.permute.xlu0 %968
        %970 = vrot.lane.b32.xlu0 %v907, 17
        %v971 = vpop.permute.xlu0 %970
        %972 = vrot.lane.b32.xlu0 %v909, 17
        %v973 = vpop.permute.xlu0 %972
        %974 = vrot.lane.b32.xlu0 %v911, 17
        %v975 = vpop.permute.xlu0 %974
        %976 = vrot.lane.b32.xlu0 %v913, 17
        %v977 = vpop.permute.xlu0 %976
        %978 = vrot.lane.b32.xlu0 %v915, 17
        %v979 = vpop.permute.xlu0 %978
        %980 = vrot.lane.b32.xlu0 %v917, 17
        %v981 = vpop.permute.xlu0 %980
        %982 = vrot.lane.b32.xlu0 %v919, 17
        %v983 = vpop.permute.xlu0 %982
        %984 = vrot.lane.b32.xlu0 %v921, 17
        %v985 = vpop.permute.xlu0 %984
        %986 = vrot.lane.b32.xlu0 %v923, 17
        %v987 = vpop.permute.xlu0 %986
        %988 = vrot.lane.b32.xlu0 %v925, 17
        %v989 = vpop.permute.xlu0 %988
        %990 = vrot.lane.b32.xlu0 %v927, 17
        %v991 = vpop.permute.xlu0 %990
        %992 = vrot.lane.b32.xlu0 %v929, 17
        %v993 = vpop.permute.xlu0 %992
        %v994 = vsel %vm352, %v931, %v963
        %v995 = vsel %vm352, %v933, %v965
        %v996 = vsel %vm352, %v935, %v967
        %v997 = vsel %vm352, %v937, %v969
        %v998 = vsel %vm352, %v939, %v971
        %v999 = vsel %vm352, %v941, %v973
        %v1000 = vsel %vm352, %v943, %v975
        %v1001 = vsel %vm352, %v945, %v977
        %v1002 = vsel %vm352, %v947, %v979
        %v1003 = vsel %vm352, %v949, %v981
        %v1004 = vsel %vm352, %v951, %v983
        %v1005 = vsel %vm352, %v953, %v985
        %v1006 = vsel %vm352, %v955, %v987
        %v1007 = vsel %vm352, %v957, %v989
        %v1008 = vsel %vm352, %v959, %v991
        %v1009 = vsel %vm352, %v961, %v993
        %v1010 = vsel %vm352, %v963, %v931
        %v1011 = vsel %vm352, %v965, %v933
        %v1012 = vsel %vm352, %v967, %v935
        %v1013 = vsel %vm352, %v969, %v937
        %v1014 = vsel %vm352, %v971, %v939
        %v1015 = vsel %vm352, %v973, %v941
        %v1016 = vsel %vm352, %v975, %v943
        %v1017 = vsel %vm352, %v977, %v945
        %v1018 = vsel %vm352, %v979, %v947
        %v1019 = vsel %vm352, %v981, %v949
        %v1020 = vsel %vm352, %v983, %v951
        %v1021 = vsel %vm352, %v985, %v953
        %v1022 = vsel %vm352, %v987, %v955
        %v1023 = vsel %vm352, %v989, %v957
        %v1024 = vsel %vm352, %v991, %v959
        %v1025 = vsel %vm352, %v993, %v961
        %v1026 = vmul.f32 %v1010, %v360
        %v1027 = vmul.f32 %v994, %v364
        %v1028 = vmul.f32 %v1011, %v360
        %v1029 = vmul.f32 %v995, %v364
        %v1030 = vmul.f32 %v1012, %v360
        %v1031 = vmul.f32 %v996, %v364
        %v1032 = vmul.f32 %v1013, %v360
        %v1033 = vmul.f32 %v997, %v364
        %v1034 = vmul.f32 %v1014, %v360
        %v1035 = vmul.f32 %v998, %v364
        %v1036 = vmul.f32 %v1015, %v360
        %v1037 = vmul.f32 %v999, %v364
        %v1038 = vmul.f32 %v1016, %v360
        %v1039 = vmul.f32 %v1000, %v364
        %v1040 = vmul.f32 %v1017, %v360
        %v1041 = vmul.f32 %v1001, %v364
        %v1042 = vmul.f32 %v1018, %v360
        %v1043 = vmul.f32 %v1002, %v364
        %v1044 = vmul.f32 %v1019, %v360
        %v1045 = vmul.f32 %v1003, %v364
        %v1046 = vmul.f32 %v1020, %v360
        %v1047 = vmul.f32 %v1004, %v364
        %v1048 = vmul.f32 %v1021, %v360
        %v1049 = vmul.f32 %v1005, %v364
        %v1050 = vmul.f32 %v1022, %v360
        %v1051 = vmul.f32 %v1006, %v364
        %v1052 = vmul.f32 %v1023, %v360
        %v1053 = vmul.f32 %v1007, %v364
        %v1054 = vmul.f32 %v1024, %v360
        %v1055 = vmul.f32 %v1008, %v364
        %v1056 = vmul.f32 %v1025, %v360
        %v1057 = vmul.f32 %v1009, %v364
        %1058 = vrot.lane.b32.xlu0 %v898, 16
        %v1059 = vpop.permute.xlu0 %1058
        %1060 = vrot.lane.b32.xlu0 %v900, 16
        %v1061 = vpop.permute.xlu0 %1060
        %1062 = vrot.lane.b32.xlu0 %v902, 16
        %v1063 = vpop.permute.xlu0 %1062
        %1064 = vrot.lane.b32.xlu0 %v904, 16
        %v1065 = vpop.permute.xlu0 %1064
        %1066 = vrot.lane.b32.xlu0 %v906, 16
        %v1067 = vpop.permute.xlu0 %1066
        %1068 = vrot.lane.b32.xlu0 %v908, 16
        %v1069 = vpop.permute.xlu0 %1068
        %1070 = vrot.lane.b32.xlu0 %v910, 16
        %v1071 = vpop.permute.xlu0 %1070
        %1072 = vrot.lane.b32.xlu0 %v912, 16
        %v1073 = vpop.permute.xlu0 %1072
        %1074 = vrot.lane.b32.xlu0 %v914, 16
        %v1075 = vpop.permute.xlu0 %1074
        %1076 = vrot.lane.b32.xlu0 %v916, 16
        %v1077 = vpop.permute.xlu0 %1076
        %1078 = vrot.lane.b32.xlu0 %v918, 16
        %v1079 = vpop.permute.xlu0 %1078
        %1080 = vrot.lane.b32.xlu0 %v920, 16
        %v1081 = vpop.permute.xlu0 %1080
        %1082 = vrot.lane.b32.xlu0 %v922, 16
        %v1083 = vpop.permute.xlu0 %1082
        %1084 = vrot.lane.b32.xlu0 %v924, 16
        %v1085 = vpop.permute.xlu0 %1084
        %1086 = vrot.lane.b32.xlu0 %v926, 16
        %v1087 = vpop.permute.xlu0 %1086
        %1088 = vrot.lane.b32.xlu0 %v928, 16
        %v1089 = vpop.permute.xlu0 %1088
        %1090 = vrot.lane.b32.xlu0 %v899, 16
        %v1091 = vpop.permute.xlu0 %1090
        %1092 = vrot.lane.b32.xlu0 %v901, 16
        %v1093 = vpop.permute.xlu0 %1092
        %1094 = vrot.lane.b32.xlu0 %v903, 16
        %v1095 = vpop.permute.xlu0 %1094
        %1096 = vrot.lane.b32.xlu0 %v905, 16
        %v1097 = vpop.permute.xlu0 %1096
        %1098 = vrot.lane.b32.xlu0 %v907, 16
        %v1099 = vpop.permute.xlu0 %1098
        %1100 = vrot.lane.b32.xlu0 %v909, 16
        %v1101 = vpop.permute.xlu0 %1100
        %1102 = vrot.lane.b32.xlu0 %v911, 16
        %v1103 = vpop.permute.xlu0 %1102
        %1104 = vrot.lane.b32.xlu0 %v913, 16
        %v1105 = vpop.permute.xlu0 %1104
        %1106 = vrot.lane.b32.xlu0 %v915, 16
        %v1107 = vpop.permute.xlu0 %1106
        %1108 = vrot.lane.b32.xlu0 %v917, 16
        %v1109 = vpop.permute.xlu0 %1108
        %1110 = vrot.lane.b32.xlu0 %v919, 16
        %v1111 = vpop.permute.xlu0 %1110
        %1112 = vrot.lane.b32.xlu0 %v921, 16
        %v1113 = vpop.permute.xlu0 %1112
        %1114 = vrot.lane.b32.xlu0 %v923, 16
        %v1115 = vpop.permute.xlu0 %1114
        %1116 = vrot.lane.b32.xlu0 %v925, 16
        %v1117 = vpop.permute.xlu0 %1116
        %1118 = vrot.lane.b32.xlu0 %v927, 16
        %v1119 = vpop.permute.xlu0 %1118
        %1120 = vrot.lane.b32.xlu0 %v929, 16
        %v1121 = vpop.permute.xlu0 %1120
        %v1122 = vsel %vm373, %v1059, %v1091
        %v1123 = vsel %vm373, %v1061, %v1093
        %v1124 = vsel %vm373, %v1063, %v1095
        %v1125 = vsel %vm373, %v1065, %v1097
        %v1126 = vsel %vm373, %v1067, %v1099
        %v1127 = vsel %vm373, %v1069, %v1101
        %v1128 = vsel %vm373, %v1071, %v1103
        %v1129 = vsel %vm373, %v1073, %v1105
        %v1130 = vsel %vm373, %v1075, %v1107
        %v1131 = vsel %vm373, %v1077, %v1109
        %v1132 = vsel %vm373, %v1079, %v1111
        %v1133 = vsel %vm373, %v1081, %v1113
        %v1134 = vsel %vm373, %v1083, %v1115
        %v1135 = vsel %vm373, %v1085, %v1117
        %v1136 = vsel %vm373, %v1087, %v1119
        %v1137 = vsel %vm373, %v1089, %v1121
        %v1138 = vsel %vm373, %v1091, %v1059
        %v1139 = vsel %vm373, %v1093, %v1061
        %v1140 = vsel %vm373, %v1095, %v1063
        %v1141 = vsel %vm373, %v1097, %v1065
        %v1142 = vsel %vm373, %v1099, %v1067
        %v1143 = vsel %vm373, %v1101, %v1069
        %v1144 = vsel %vm373, %v1103, %v1071
        %v1145 = vsel %vm373, %v1105, %v1073
        %v1146 = vsel %vm373, %v1107, %v1075
        %v1147 = vsel %vm373, %v1109, %v1077
        %v1148 = vsel %vm373, %v1111, %v1079
        %v1149 = vsel %vm373, %v1113, %v1081
        %v1150 = vsel %vm373, %v1115, %v1083
        %v1151 = vsel %vm373, %v1117, %v1085
        %v1152 = vsel %vm373, %v1119, %v1087
        %v1153 = vsel %vm373, %v1121, %v1089
        %v1154 = vmul.f32 %v1138, %v382
        %v1155 = vmul.f32 %v1122, %v386
        %v1156 = vmul.f32 %v1139, %v382
        %v1157 = vmul.f32 %v1123, %v386
        %v1158 = vmul.f32 %v1140, %v382
        %v1159 = vmul.f32 %v1124, %v386
        %v1160 = vmul.f32 %v1141, %v382
        %v1161 = vmul.f32 %v1125, %v386
        %v1162 = vmul.f32 %v1142, %v382
        %v1163 = vmul.f32 %v1126, %v386
        %v1164 = vmul.f32 %v1143, %v382
        %v1165 = vmul.f32 %v1127, %v386
        %v1166 = vmul.f32 %v1144, %v382
        %v1167 = vmul.f32 %v1128, %v386
        %v1168 = vmul.f32 %v1145, %v382
        %v1169 = vmul.f32 %v1129, %v386
        %v1170 = vmul.f32 %v1146, %v382
        %v1171 = vmul.f32 %v1130, %v386
        %v1172 = vmul.f32 %v1147, %v382
        %v1173 = vmul.f32 %v1131, %v386
        %v1174 = vmul.f32 %v1148, %v382
        %v1175 = vmul.f32 %v1132, %v386
        %v1176 = vmul.f32 %v1149, %v382
        %v1177 = vmul.f32 %v1133, %v386
        %v1178 = vmul.f32 %v1150, %v382
        %v1179 = vmul.f32 %v1134, %v386
        %v1180 = vmul.f32 %v1151, %v382
        %v1181 = vmul.f32 %v1135, %v386
        %v1182 = vmul.f32 %v1152, %v382
        %v1183 = vmul.f32 %v1136, %v386
        %v1184 = vmul.f32 %v1153, %v382
        %v1185 = vmul.f32 %v1137, %v386
        %1186 = vrot.lane.b32.xlu0 %v898, 15
        %v1187 = vpop.permute.xlu0 %1186
        %1188 = vrot.lane.b32.xlu0 %v900, 15
        %v1189 = vpop.permute.xlu0 %1188
        %1190 = vrot.lane.b32.xlu0 %v902, 15
        %v1191 = vpop.permute.xlu0 %1190
        %1192 = vrot.lane.b32.xlu0 %v904, 15
        %v1193 = vpop.permute.xlu0 %1192
        %1194 = vrot.lane.b32.xlu0 %v906, 15
        %v1195 = vpop.permute.xlu0 %1194
        %1196 = vrot.lane.b32.xlu0 %v908, 15
        %v1197 = vpop.permute.xlu0 %1196
        %1198 = vrot.lane.b32.xlu0 %v910, 15
        %v1199 = vpop.permute.xlu0 %1198
        %1200 = vrot.lane.b32.xlu0 %v912, 15
        %v1201 = vpop.permute.xlu0 %1200
        %1202 = vrot.lane.b32.xlu0 %v914, 15
        %v1203 = vpop.permute.xlu0 %1202
        %1204 = vrot.lane.b32.xlu0 %v916, 15
        %v1205 = vpop.permute.xlu0 %1204
        %1206 = vrot.lane.b32.xlu0 %v918, 15
        %v1207 = vpop.permute.xlu0 %1206
        %1208 = vrot.lane.b32.xlu0 %v920, 15
        %v1209 = vpop.permute.xlu0 %1208
        %1210 = vrot.lane.b32.xlu0 %v922, 15
        %v1211 = vpop.permute.xlu0 %1210
        %1212 = vrot.lane.b32.xlu0 %v924, 15
        %v1213 = vpop.permute.xlu0 %1212
        %1214 = vrot.lane.b32.xlu0 %v926, 15
        %v1215 = vpop.permute.xlu0 %1214
        %1216 = vrot.lane.b32.xlu0 %v928, 15
        %v1217 = vpop.permute.xlu0 %1216
        %1218 = vrot.lane.b32.xlu0 %v899, 15
        %v1219 = vpop.permute.xlu0 %1218
        %1220 = vrot.lane.b32.xlu0 %v901, 15
        %v1221 = vpop.permute.xlu0 %1220
        %1222 = vrot.lane.b32.xlu0 %v903, 15
        %v1223 = vpop.permute.xlu0 %1222
        %1224 = vrot.lane.b32.xlu0 %v905, 15
        %v1225 = vpop.permute.xlu0 %1224
        %1226 = vrot.lane.b32.xlu0 %v907, 15
        %v1227 = vpop.permute.xlu0 %1226
        %1228 = vrot.lane.b32.xlu0 %v909, 15
        %v1229 = vpop.permute.xlu0 %1228
        %1230 = vrot.lane.b32.xlu0 %v911, 15
        %v1231 = vpop.permute.xlu0 %1230
        %1232 = vrot.lane.b32.xlu0 %v913, 15
        %v1233 = vpop.permute.xlu0 %1232
        %1234 = vrot.lane.b32.xlu0 %v915, 15
        %v1235 = vpop.permute.xlu0 %1234
        %1236 = vrot.lane.b32.xlu0 %v917, 15
        %v1237 = vpop.permute.xlu0 %1236
        %1238 = vrot.lane.b32.xlu0 %v919, 15
        %v1239 = vpop.permute.xlu0 %1238
        %1240 = vrot.lane.b32.xlu0 %v921, 15
        %v1241 = vpop.permute.xlu0 %1240
        %1242 = vrot.lane.b32.xlu0 %v923, 15
        %v1243 = vpop.permute.xlu0 %1242
        %1244 = vrot.lane.b32.xlu0 %v925, 15
        %v1245 = vpop.permute.xlu0 %1244
        %1246 = vrot.lane.b32.xlu0 %v927, 15
        %v1247 = vpop.permute.xlu0 %1246
        %1248 = vrot.lane.b32.xlu0 %v929, 15
        %v1249 = vpop.permute.xlu0 %1248
        %v1250 = vsel %vm395, %v1187, %v1219
        %v1251 = vsel %vm395, %v1189, %v1221
        %v1252 = vsel %vm395, %v1191, %v1223
        %v1253 = vsel %vm395, %v1193, %v1225
        %v1254 = vsel %vm395, %v1195, %v1227
        %v1255 = vsel %vm395, %v1197, %v1229
        %v1256 = vsel %vm395, %v1199, %v1231
        %v1257 = vsel %vm395, %v1201, %v1233
        %v1258 = vsel %vm395, %v1203, %v1235
        %v1259 = vsel %vm395, %v1205, %v1237
        %v1260 = vsel %vm395, %v1207, %v1239
        %v1261 = vsel %vm395, %v1209, %v1241
        %v1262 = vsel %vm395, %v1211, %v1243
        %v1263 = vsel %vm395, %v1213, %v1245
        %v1264 = vsel %vm395, %v1215, %v1247
        %v1265 = vsel %vm395, %v1217, %v1249
        %v1266 = vsel %vm395, %v1219, %v1187
        %v1267 = vsel %vm395, %v1221, %v1189
        %v1268 = vsel %vm395, %v1223, %v1191
        %v1269 = vsel %vm395, %v1225, %v1193
        %v1270 = vsel %vm395, %v1227, %v1195
        %v1271 = vsel %vm395, %v1229, %v1197
        %v1272 = vsel %vm395, %v1231, %v1199
        %v1273 = vsel %vm395, %v1233, %v1201
        %v1274 = vsel %vm395, %v1235, %v1203
        %v1275 = vsel %vm395, %v1237, %v1205
        %v1276 = vsel %vm395, %v1239, %v1207
        %v1277 = vsel %vm395, %v1241, %v1209
        %v1278 = vsel %vm395, %v1243, %v1211
        %v1279 = vsel %vm395, %v1245, %v1213
        %v1280 = vsel %vm395, %v1247, %v1215
        %v1281 = vsel %vm395, %v1249, %v1217
        %v1282 = vmul.f32 %v1266, %v404
        %v1283 = vmul.f32 %v1250, %v408
        %v1284 = vmul.f32 %v1267, %v404
        %v1285 = vmul.f32 %v1251, %v408
        %v1286 = vmul.f32 %v1268, %v404
        %v1287 = vmul.f32 %v1252, %v408
        %v1288 = vmul.f32 %v1269, %v404
        %v1289 = vmul.f32 %v1253, %v408
        %v1290 = vmul.f32 %v1270, %v404
        %v1291 = vmul.f32 %v1254, %v408
        %v1292 = vmul.f32 %v1271, %v404
        %v1293 = vmul.f32 %v1255, %v408
        %v1294 = vmul.f32 %v1272, %v404
        %v1295 = vmul.f32 %v1256, %v408
        %v1296 = vmul.f32 %v1273, %v404
        %v1297 = vmul.f32 %v1257, %v408
        %v1298 = vmul.f32 %v1274, %v404
        %v1299 = vmul.f32 %v1258, %v408
        %v1300 = vmul.f32 %v1275, %v404
        %v1301 = vmul.f32 %v1259, %v408
        %v1302 = vmul.f32 %v1276, %v404
        %v1303 = vmul.f32 %v1260, %v408
        %v1304 = vmul.f32 %v1277, %v404
        %v1305 = vmul.f32 %v1261, %v408
        %v1306 = vmul.f32 %v1278, %v404
        %v1307 = vmul.f32 %v1262, %v408
        %v1308 = vmul.f32 %v1279, %v404
        %v1309 = vmul.f32 %v1263, %v408
        %v1310 = vmul.f32 %v1280, %v404
        %v1311 = vmul.f32 %v1264, %v408
        %v1312 = vmul.f32 %v1281, %v404
        %v1313 = vmul.f32 %v1265, %v408
        %1314 = vrot.lane.b32.xlu0 %v898, 1
        %v1315 = vpop.permute.xlu0 %1314
        %1316 = vrot.lane.b32.xlu0 %v900, 1
        %v1317 = vpop.permute.xlu0 %1316
        %1318 = vrot.lane.b32.xlu0 %v902, 1
        %v1319 = vpop.permute.xlu0 %1318
        %1320 = vrot.lane.b32.xlu0 %v904, 1
        %v1321 = vpop.permute.xlu0 %1320
        %1322 = vrot.lane.b32.xlu0 %v906, 1
        %v1323 = vpop.permute.xlu0 %1322
        %1324 = vrot.lane.b32.xlu0 %v908, 1
        %v1325 = vpop.permute.xlu0 %1324
        %1326 = vrot.lane.b32.xlu0 %v910, 1
        %v1327 = vpop.permute.xlu0 %1326
        %1328 = vrot.lane.b32.xlu0 %v912, 1
        %v1329 = vpop.permute.xlu0 %1328
        %1330 = vrot.lane.b32.xlu0 %v914, 1
        %v1331 = vpop.permute.xlu0 %1330
        %1332 = vrot.lane.b32.xlu0 %v916, 1
        %v1333 = vpop.permute.xlu0 %1332
        %1334 = vrot.lane.b32.xlu0 %v918, 1
        %v1335 = vpop.permute.xlu0 %1334
        %1336 = vrot.lane.b32.xlu0 %v920, 1
        %v1337 = vpop.permute.xlu0 %1336
        %1338 = vrot.lane.b32.xlu0 %v922, 1
        %v1339 = vpop.permute.xlu0 %1338
        %1340 = vrot.lane.b32.xlu0 %v924, 1
        %v1341 = vpop.permute.xlu0 %1340
        %1342 = vrot.lane.b32.xlu0 %v926, 1
        %v1343 = vpop.permute.xlu0 %1342
        %1344 = vrot.lane.b32.xlu0 %v928, 1
        %v1345 = vpop.permute.xlu0 %1344
        %1346 = vrot.lane.b32.xlu0 %v899, 1
        %v1347 = vpop.permute.xlu0 %1346
        %1348 = vrot.lane.b32.xlu0 %v901, 1
        %v1349 = vpop.permute.xlu0 %1348
        %1350 = vrot.lane.b32.xlu0 %v903, 1
        %v1351 = vpop.permute.xlu0 %1350
        %1352 = vrot.lane.b32.xlu0 %v905, 1
        %v1353 = vpop.permute.xlu0 %1352
        %1354 = vrot.lane.b32.xlu0 %v907, 1
        %v1355 = vpop.permute.xlu0 %1354
        %1356 = vrot.lane.b32.xlu0 %v909, 1
        %v1357 = vpop.permute.xlu0 %1356
        %1358 = vrot.lane.b32.xlu0 %v911, 1
        %v1359 = vpop.permute.xlu0 %1358
        %1360 = vrot.lane.b32.xlu0 %v913, 1
        %v1361 = vpop.permute.xlu0 %1360
        %1362 = vrot.lane.b32.xlu0 %v915, 1
        %v1363 = vpop.permute.xlu0 %1362
        %1364 = vrot.lane.b32.xlu0 %v917, 1
        %v1365 = vpop.permute.xlu0 %1364
        %1366 = vrot.lane.b32.xlu0 %v919, 1
        %v1367 = vpop.permute.xlu0 %1366
        %1368 = vrot.lane.b32.xlu0 %v921, 1
        %v1369 = vpop.permute.xlu0 %1368
        %1370 = vrot.lane.b32.xlu0 %v923, 1
        %v1371 = vpop.permute.xlu0 %1370
        %1372 = vrot.lane.b32.xlu0 %v925, 1
        %v1373 = vpop.permute.xlu0 %1372
        %1374 = vrot.lane.b32.xlu0 %v927, 1
        %v1375 = vpop.permute.xlu0 %1374
        %1376 = vrot.lane.b32.xlu0 %v929, 1
        %v1377 = vpop.permute.xlu0 %1376
        %v1378 = vsel %vm417, %v1315, %v1347
        %v1379 = vsel %vm417, %v1317, %v1349
        %v1380 = vsel %vm417, %v1319, %v1351
        %v1381 = vsel %vm417, %v1321, %v1353
        %v1382 = vsel %vm417, %v1323, %v1355
        %v1383 = vsel %vm417, %v1325, %v1357
        %v1384 = vsel %vm417, %v1327, %v1359
        %v1385 = vsel %vm417, %v1329, %v1361
        %v1386 = vsel %vm417, %v1331, %v1363
        %v1387 = vsel %vm417, %v1333, %v1365
        %v1388 = vsel %vm417, %v1335, %v1367
        %v1389 = vsel %vm417, %v1337, %v1369
        %v1390 = vsel %vm417, %v1339, %v1371
        %v1391 = vsel %vm417, %v1341, %v1373
        %v1392 = vsel %vm417, %v1343, %v1375
        %v1393 = vsel %vm417, %v1345, %v1377
        %v1394 = vsel %vm417, %v1347, %v1315
        %v1395 = vsel %vm417, %v1349, %v1317
        %v1396 = vsel %vm417, %v1351, %v1319
        %v1397 = vsel %vm417, %v1353, %v1321
        %v1398 = vsel %vm417, %v1355, %v1323
        %v1399 = vsel %vm417, %v1357, %v1325
        %v1400 = vsel %vm417, %v1359, %v1327
        %v1401 = vsel %vm417, %v1361, %v1329
        %v1402 = vsel %vm417, %v1363, %v1331
        %v1403 = vsel %vm417, %v1365, %v1333
        %v1404 = vsel %vm417, %v1367, %v1335
        %v1405 = vsel %vm417, %v1369, %v1337
        %v1406 = vsel %vm417, %v1371, %v1339
        %v1407 = vsel %vm417, %v1373, %v1341
        %v1408 = vsel %vm417, %v1375, %v1343
        %v1409 = vsel %vm417, %v1377, %v1345
        %v1410 = vmul.f32 %v1394, %v426
        %v1411 = vmul.f32 %v1378, %v430
        %v1412 = vmul.f32 %v1395, %v426
        %v1413 = vmul.f32 %v1379, %v430
        %v1414 = vmul.f32 %v1396, %v426
        %v1415 = vmul.f32 %v1380, %v430
        %v1416 = vmul.f32 %v1397, %v426
        %v1417 = vmul.f32 %v1381, %v430
        %v1418 = vmul.f32 %v1398, %v426
        %v1419 = vmul.f32 %v1382, %v430
        %v1420 = vmul.f32 %v1399, %v426
        %v1421 = vmul.f32 %v1383, %v430
        %v1422 = vmul.f32 %v1400, %v426
        %v1423 = vmul.f32 %v1384, %v430
        %v1424 = vmul.f32 %v1401, %v426
        %v1425 = vmul.f32 %v1385, %v430
        %v1426 = vmul.f32 %v1402, %v426
        %v1427 = vmul.f32 %v1386, %v430
        %v1428 = vmul.f32 %v1403, %v426
        %v1429 = vmul.f32 %v1387, %v430
        %v1430 = vmul.f32 %v1404, %v426
        %v1431 = vmul.f32 %v1388, %v430
        %v1432 = vmul.f32 %v1405, %v426
        %v1433 = vmul.f32 %v1389, %v430
        %v1434 = vmul.f32 %v1406, %v426
        %v1435 = vmul.f32 %v1390, %v430
        %v1436 = vmul.f32 %v1407, %v426
        %v1437 = vmul.f32 %v1391, %v430
        %v1438 = vmul.f32 %v1408, %v426
        %v1439 = vmul.f32 %v1392, %v430
        %v1440 = vmul.f32 %v1409, %v426
        %v1441 = vmul.f32 %v1393, %v430
        %v1444 = vmul.f32 %v898, %v441
        %v1445 = vmul.f32 %v899, %v445
        %v1446 = vmul.f32 %v900, %v441
        %v1447 = vmul.f32 %v901, %v445
        %v1448 = vmul.f32 %v902, %v441
        %v1449 = vmul.f32 %v903, %v445
        %v1450 = vmul.f32 %v904, %v441
        %v1451 = vmul.f32 %v905, %v445
        %v1452 = vmul.f32 %v906, %v441
        %v1453 = vmul.f32 %v907, %v445
        %v1454 = vmul.f32 %v908, %v441
        %v1455 = vmul.f32 %v909, %v445
        %v1456 = vmul.f32 %v910, %v441
        %v1457 = vmul.f32 %v911, %v445
        %v1458 = vmul.f32 %v912, %v441
        %v1459 = vmul.f32 %v913, %v445
        %v1460 = vmul.f32 %v914, %v441
        %v1461 = vmul.f32 %v915, %v445
        %v1462 = vmul.f32 %v916, %v441
        %v1463 = vmul.f32 %v917, %v445
        %v1464 = vmul.f32 %v918, %v441
        %v1465 = vmul.f32 %v919, %v445
        %v1466 = vmul.f32 %v920, %v441
        %v1467 = vmul.f32 %v921, %v445
        %v1468 = vmul.f32 %v922, %v441
        %v1469 = vmul.f32 %v923, %v445
        %v1470 = vmul.f32 %v924, %v441
        %v1471 = vmul.f32 %v925, %v445
        %v1472 = vmul.f32 %v926, %v441
        %v1473 = vmul.f32 %v927, %v445
        %v1474 = vmul.f32 %v928, %v441
        %v1475 = vmul.f32 %v929, %v445
        %1476 = vrot.lane.b32.xlu0 %v898, 127
        %v1477 = vpop.permute.xlu0 %1476
        %1478 = vrot.lane.b32.xlu0 %v900, 127
        %v1479 = vpop.permute.xlu0 %1478
        %1480 = vrot.lane.b32.xlu0 %v902, 127
        %v1481 = vpop.permute.xlu0 %1480
        %1482 = vrot.lane.b32.xlu0 %v904, 127
        %v1483 = vpop.permute.xlu0 %1482
        %1484 = vrot.lane.b32.xlu0 %v906, 127
        %v1485 = vpop.permute.xlu0 %1484
        %1486 = vrot.lane.b32.xlu0 %v908, 127
        %v1487 = vpop.permute.xlu0 %1486
        %1488 = vrot.lane.b32.xlu0 %v910, 127
        %v1489 = vpop.permute.xlu0 %1488
        %1490 = vrot.lane.b32.xlu0 %v912, 127
        %v1491 = vpop.permute.xlu0 %1490
        %1492 = vrot.lane.b32.xlu0 %v914, 127
        %v1493 = vpop.permute.xlu0 %1492
        %1494 = vrot.lane.b32.xlu0 %v916, 127
        %v1495 = vpop.permute.xlu0 %1494
        %1496 = vrot.lane.b32.xlu0 %v918, 127
        %v1497 = vpop.permute.xlu0 %1496
        %1498 = vrot.lane.b32.xlu0 %v920, 127
        %v1499 = vpop.permute.xlu0 %1498
        %1500 = vrot.lane.b32.xlu0 %v922, 127
        %v1501 = vpop.permute.xlu0 %1500
        %1502 = vrot.lane.b32.xlu0 %v924, 127
        %v1503 = vpop.permute.xlu0 %1502
        %1504 = vrot.lane.b32.xlu0 %v926, 127
        %v1505 = vpop.permute.xlu0 %1504
        %1506 = vrot.lane.b32.xlu0 %v928, 127
        %v1507 = vpop.permute.xlu0 %1506
        %1508 = vrot.lane.b32.xlu0 %v899, 127
        %v1509 = vpop.permute.xlu0 %1508
        %1510 = vrot.lane.b32.xlu0 %v901, 127
        %v1511 = vpop.permute.xlu0 %1510
        %1512 = vrot.lane.b32.xlu0 %v903, 127
        %v1513 = vpop.permute.xlu0 %1512
        %1514 = vrot.lane.b32.xlu0 %v905, 127
        %v1515 = vpop.permute.xlu0 %1514
        %1516 = vrot.lane.b32.xlu0 %v907, 127
        %v1517 = vpop.permute.xlu0 %1516
        %1518 = vrot.lane.b32.xlu0 %v909, 127
        %v1519 = vpop.permute.xlu0 %1518
        %1520 = vrot.lane.b32.xlu0 %v911, 127
        %v1521 = vpop.permute.xlu0 %1520
        %1522 = vrot.lane.b32.xlu0 %v913, 127
        %v1523 = vpop.permute.xlu0 %1522
        %1524 = vrot.lane.b32.xlu0 %v915, 127
        %v1525 = vpop.permute.xlu0 %1524
        %1526 = vrot.lane.b32.xlu0 %v917, 127
        %v1527 = vpop.permute.xlu0 %1526
        %1528 = vrot.lane.b32.xlu0 %v919, 127
        %v1529 = vpop.permute.xlu0 %1528
        %1530 = vrot.lane.b32.xlu0 %v921, 127
        %v1531 = vpop.permute.xlu0 %1530
        %1532 = vrot.lane.b32.xlu0 %v923, 127
        %v1533 = vpop.permute.xlu0 %1532
        %1534 = vrot.lane.b32.xlu0 %v925, 127
        %v1535 = vpop.permute.xlu0 %1534
        %1536 = vrot.lane.b32.xlu0 %v927, 127
        %v1537 = vpop.permute.xlu0 %1536
        %1538 = vrot.lane.b32.xlu0 %v929, 127
        %v1539 = vpop.permute.xlu0 %1538
        %v1540 = vsel %vm453, %v1477, %v1509
        %v1541 = vsel %vm453, %v1479, %v1511
        %v1542 = vsel %vm453, %v1481, %v1513
        %v1543 = vsel %vm453, %v1483, %v1515
        %v1544 = vsel %vm453, %v1485, %v1517
        %v1545 = vsel %vm453, %v1487, %v1519
        %v1546 = vsel %vm453, %v1489, %v1521
        %v1547 = vsel %vm453, %v1491, %v1523
        %v1548 = vsel %vm453, %v1493, %v1525
        %v1549 = vsel %vm453, %v1495, %v1527
        %v1550 = vsel %vm453, %v1497, %v1529
        %v1551 = vsel %vm453, %v1499, %v1531
        %v1552 = vsel %vm453, %v1501, %v1533
        %v1553 = vsel %vm453, %v1503, %v1535
        %v1554 = vsel %vm453, %v1505, %v1537
        %v1555 = vsel %vm453, %v1507, %v1539
        %v1556 = vsel %vm453, %v1509, %v1477
        %v1557 = vsel %vm453, %v1511, %v1479
        %v1558 = vsel %vm453, %v1513, %v1481
        %v1559 = vsel %vm453, %v1515, %v1483
        %v1560 = vsel %vm453, %v1517, %v1485
        %v1561 = vsel %vm453, %v1519, %v1487
        %v1562 = vsel %vm453, %v1521, %v1489
        %v1563 = vsel %vm453, %v1523, %v1491
        %v1564 = vsel %vm453, %v1525, %v1493
        %v1565 = vsel %vm453, %v1527, %v1495
        %v1566 = vsel %vm453, %v1529, %v1497
        %v1567 = vsel %vm453, %v1531, %v1499
        %v1568 = vsel %vm453, %v1533, %v1501
        %v1569 = vsel %vm453, %v1535, %v1503
        %v1570 = vsel %vm453, %v1537, %v1505
        %v1571 = vsel %vm453, %v1539, %v1507
        %v1572 = vmul.f32 %v1540, %v462
        %v1573 = vmul.f32 %v1556, %v466
        %v1574 = vmul.f32 %v1541, %v462
        %v1575 = vmul.f32 %v1557, %v466
        %v1576 = vmul.f32 %v1542, %v462
        %v1577 = vmul.f32 %v1558, %v466
        %v1578 = vmul.f32 %v1543, %v462
        %v1579 = vmul.f32 %v1559, %v466
        %v1580 = vmul.f32 %v1544, %v462
        %v1581 = vmul.f32 %v1560, %v466
        %v1582 = vmul.f32 %v1545, %v462
        %v1583 = vmul.f32 %v1561, %v466
        %v1584 = vmul.f32 %v1546, %v462
        %v1585 = vmul.f32 %v1562, %v466
        %v1586 = vmul.f32 %v1547, %v462
        %v1587 = vmul.f32 %v1563, %v466
        %v1588 = vmul.f32 %v1548, %v462
        %v1589 = vmul.f32 %v1564, %v466
        %v1590 = vmul.f32 %v1549, %v462
        %v1591 = vmul.f32 %v1565, %v466
        %v1592 = vmul.f32 %v1550, %v462
        %v1593 = vmul.f32 %v1566, %v466
        %v1594 = vmul.f32 %v1551, %v462
        %v1595 = vmul.f32 %v1567, %v466
        %v1596 = vmul.f32 %v1552, %v462
        %v1597 = vmul.f32 %v1568, %v466
        %v1598 = vmul.f32 %v1553, %v462
        %v1599 = vmul.f32 %v1569, %v466
        %v1600 = vmul.f32 %v1554, %v462
        %v1601 = vmul.f32 %v1570, %v466
        %v1602 = vmul.f32 %v1555, %v462
        %v1603 = vmul.f32 %v1571, %v466
        %1604 = vrot.lane.b32.xlu0 %v898, 113
        %v1605 = vpop.permute.xlu0 %1604
        %1606 = vrot.lane.b32.xlu0 %v900, 113
        %v1607 = vpop.permute.xlu0 %1606
        %1608 = vrot.lane.b32.xlu0 %v902, 113
        %v1609 = vpop.permute.xlu0 %1608
        %1610 = vrot.lane.b32.xlu0 %v904, 113
        %v1611 = vpop.permute.xlu0 %1610
        %1612 = vrot.lane.b32.xlu0 %v906, 113
        %v1613 = vpop.permute.xlu0 %1612
        %1614 = vrot.lane.b32.xlu0 %v908, 113
        %v1615 = vpop.permute.xlu0 %1614
        %1616 = vrot.lane.b32.xlu0 %v910, 113
        %v1617 = vpop.permute.xlu0 %1616
        %1618 = vrot.lane.b32.xlu0 %v912, 113
        %v1619 = vpop.permute.xlu0 %1618
        %1620 = vrot.lane.b32.xlu0 %v914, 113
        %v1621 = vpop.permute.xlu0 %1620
        %1622 = vrot.lane.b32.xlu0 %v916, 113
        %v1623 = vpop.permute.xlu0 %1622
        %1624 = vrot.lane.b32.xlu0 %v918, 113
        %v1625 = vpop.permute.xlu0 %1624
        %1626 = vrot.lane.b32.xlu0 %v920, 113
        %v1627 = vpop.permute.xlu0 %1626
        %1628 = vrot.lane.b32.xlu0 %v922, 113
        %v1629 = vpop.permute.xlu0 %1628
        %1630 = vrot.lane.b32.xlu0 %v924, 113
        %v1631 = vpop.permute.xlu0 %1630
        %1632 = vrot.lane.b32.xlu0 %v926, 113
        %v1633 = vpop.permute.xlu0 %1632
        %1634 = vrot.lane.b32.xlu0 %v928, 113
        %v1635 = vpop.permute.xlu0 %1634
        %1636 = vrot.lane.b32.xlu0 %v899, 113
        %v1637 = vpop.permute.xlu0 %1636
        %1638 = vrot.lane.b32.xlu0 %v901, 113
        %v1639 = vpop.permute.xlu0 %1638
        %1640 = vrot.lane.b32.xlu0 %v903, 113
        %v1641 = vpop.permute.xlu0 %1640
        %1642 = vrot.lane.b32.xlu0 %v905, 113
        %v1643 = vpop.permute.xlu0 %1642
        %1644 = vrot.lane.b32.xlu0 %v907, 113
        %v1645 = vpop.permute.xlu0 %1644
        %1646 = vrot.lane.b32.xlu0 %v909, 113
        %v1647 = vpop.permute.xlu0 %1646
        %1648 = vrot.lane.b32.xlu0 %v911, 113
        %v1649 = vpop.permute.xlu0 %1648
        %1650 = vrot.lane.b32.xlu0 %v913, 113
        %v1651 = vpop.permute.xlu0 %1650
        %1652 = vrot.lane.b32.xlu0 %v915, 113
        %v1653 = vpop.permute.xlu0 %1652
        %1654 = vrot.lane.b32.xlu0 %v917, 113
        %v1655 = vpop.permute.xlu0 %1654
        %1656 = vrot.lane.b32.xlu0 %v919, 113
        %v1657 = vpop.permute.xlu0 %1656
        %1658 = vrot.lane.b32.xlu0 %v921, 113
        %v1659 = vpop.permute.xlu0 %1658
        %1660 = vrot.lane.b32.xlu0 %v923, 113
        %v1661 = vpop.permute.xlu0 %1660
        %1662 = vrot.lane.b32.xlu0 %v925, 113
        %v1663 = vpop.permute.xlu0 %1662
        %1664 = vrot.lane.b32.xlu0 %v927, 113
        %v1665 = vpop.permute.xlu0 %1664
        %1666 = vrot.lane.b32.xlu0 %v929, 113
        %v1667 = vpop.permute.xlu0 %1666
        %v1668 = vsel %vm475, %v1605, %v1637
        %v1669 = vsel %vm475, %v1607, %v1639
        %v1670 = vsel %vm475, %v1609, %v1641
        %v1671 = vsel %vm475, %v1611, %v1643
        %v1672 = vsel %vm475, %v1613, %v1645
        %v1673 = vsel %vm475, %v1615, %v1647
        %v1674 = vsel %vm475, %v1617, %v1649
        %v1675 = vsel %vm475, %v1619, %v1651
        %v1676 = vsel %vm475, %v1621, %v1653
        %v1677 = vsel %vm475, %v1623, %v1655
        %v1678 = vsel %vm475, %v1625, %v1657
        %v1679 = vsel %vm475, %v1627, %v1659
        %v1680 = vsel %vm475, %v1629, %v1661
        %v1681 = vsel %vm475, %v1631, %v1663
        %v1682 = vsel %vm475, %v1633, %v1665
        %v1683 = vsel %vm475, %v1635, %v1667
        %v1684 = vsel %vm475, %v1637, %v1605
        %v1685 = vsel %vm475, %v1639, %v1607
        %v1686 = vsel %vm475, %v1641, %v1609
        %v1687 = vsel %vm475, %v1643, %v1611
        %v1688 = vsel %vm475, %v1645, %v1613
        %v1689 = vsel %vm475, %v1647, %v1615
        %v1690 = vsel %vm475, %v1649, %v1617
        %v1691 = vsel %vm475, %v1651, %v1619
        %v1692 = vsel %vm475, %v1653, %v1621
        %v1693 = vsel %vm475, %v1655, %v1623
        %v1694 = vsel %vm475, %v1657, %v1625
        %v1695 = vsel %vm475, %v1659, %v1627
        %v1696 = vsel %vm475, %v1661, %v1629
        %v1697 = vsel %vm475, %v1663, %v1631
        %v1698 = vsel %vm475, %v1665, %v1633
        %v1699 = vsel %vm475, %v1667, %v1635
        %v1700 = vmul.f32 %v1668, %v484
        %v1701 = vmul.f32 %v1684, %v488
        %v1702 = vmul.f32 %v1669, %v484
        %v1703 = vmul.f32 %v1685, %v488
        %v1704 = vmul.f32 %v1670, %v484
        %v1705 = vmul.f32 %v1686, %v488
        %v1706 = vmul.f32 %v1671, %v484
        %v1707 = vmul.f32 %v1687, %v488
        %v1708 = vmul.f32 %v1672, %v484
        %v1709 = vmul.f32 %v1688, %v488
        %v1710 = vmul.f32 %v1673, %v484
        %v1711 = vmul.f32 %v1689, %v488
        %v1712 = vmul.f32 %v1674, %v484
        %v1713 = vmul.f32 %v1690, %v488
        %v1714 = vmul.f32 %v1675, %v484
        %v1715 = vmul.f32 %v1691, %v488
        %v1716 = vmul.f32 %v1676, %v484
        %v1717 = vmul.f32 %v1692, %v488
        %v1718 = vmul.f32 %v1677, %v484
        %v1719 = vmul.f32 %v1693, %v488
        %v1720 = vmul.f32 %v1678, %v484
        %v1721 = vmul.f32 %v1694, %v488
        %v1722 = vmul.f32 %v1679, %v484
        %v1723 = vmul.f32 %v1695, %v488
        %v1724 = vmul.f32 %v1680, %v484
        %v1725 = vmul.f32 %v1696, %v488
        %v1726 = vmul.f32 %v1681, %v484
        %v1727 = vmul.f32 %v1697, %v488
        %v1728 = vmul.f32 %v1682, %v484
        %v1729 = vmul.f32 %v1698, %v488
        %v1730 = vmul.f32 %v1683, %v484
        %v1731 = vmul.f32 %v1699, %v488
        %1732 = vrot.lane.b32.xlu0 %v898, 112
        %v1733 = vpop.permute.xlu0 %1732
        %1734 = vrot.lane.b32.xlu0 %v900, 112
        %v1735 = vpop.permute.xlu0 %1734
        %1736 = vrot.lane.b32.xlu0 %v902, 112
        %v1737 = vpop.permute.xlu0 %1736
        %1738 = vrot.lane.b32.xlu0 %v904, 112
        %v1739 = vpop.permute.xlu0 %1738
        %1740 = vrot.lane.b32.xlu0 %v906, 112
        %v1741 = vpop.permute.xlu0 %1740
        %1742 = vrot.lane.b32.xlu0 %v908, 112
        %v1743 = vpop.permute.xlu0 %1742
        %1744 = vrot.lane.b32.xlu0 %v910, 112
        %v1745 = vpop.permute.xlu0 %1744
        %1746 = vrot.lane.b32.xlu0 %v912, 112
        %v1747 = vpop.permute.xlu0 %1746
        %1748 = vrot.lane.b32.xlu0 %v914, 112
        %v1749 = vpop.permute.xlu0 %1748
        %1750 = vrot.lane.b32.xlu0 %v916, 112
        %v1751 = vpop.permute.xlu0 %1750
        %1752 = vrot.lane.b32.xlu0 %v918, 112
        %v1753 = vpop.permute.xlu0 %1752
        %1754 = vrot.lane.b32.xlu0 %v920, 112
        %v1755 = vpop.permute.xlu0 %1754
        %1756 = vrot.lane.b32.xlu0 %v922, 112
        %v1757 = vpop.permute.xlu0 %1756
        %1758 = vrot.lane.b32.xlu0 %v924, 112
        %v1759 = vpop.permute.xlu0 %1758
        %1760 = vrot.lane.b32.xlu0 %v926, 112
        %v1761 = vpop.permute.xlu0 %1760
        %1762 = vrot.lane.b32.xlu0 %v928, 112
        %v1763 = vpop.permute.xlu0 %1762
        %1764 = vrot.lane.b32.xlu0 %v899, 112
        %v1765 = vpop.permute.xlu0 %1764
        %1766 = vrot.lane.b32.xlu0 %v901, 112
        %v1767 = vpop.permute.xlu0 %1766
        %1768 = vrot.lane.b32.xlu0 %v903, 112
        %v1769 = vpop.permute.xlu0 %1768
        %1770 = vrot.lane.b32.xlu0 %v905, 112
        %v1771 = vpop.permute.xlu0 %1770
        %1772 = vrot.lane.b32.xlu0 %v907, 112
        %v1773 = vpop.permute.xlu0 %1772
        %1774 = vrot.lane.b32.xlu0 %v909, 112
        %v1775 = vpop.permute.xlu0 %1774
        %1776 = vrot.lane.b32.xlu0 %v911, 112
        %v1777 = vpop.permute.xlu0 %1776
        %1778 = vrot.lane.b32.xlu0 %v913, 112
        %v1779 = vpop.permute.xlu0 %1778
        %1780 = vrot.lane.b32.xlu0 %v915, 112
        %v1781 = vpop.permute.xlu0 %1780
        %1782 = vrot.lane.b32.xlu0 %v917, 112
        %v1783 = vpop.permute.xlu0 %1782
        %1784 = vrot.lane.b32.xlu0 %v919, 112
        %v1785 = vpop.permute.xlu0 %1784
        %1786 = vrot.lane.b32.xlu0 %v921, 112
        %v1787 = vpop.permute.xlu0 %1786
        %1788 = vrot.lane.b32.xlu0 %v923, 112
        %v1789 = vpop.permute.xlu0 %1788
        %1790 = vrot.lane.b32.xlu0 %v925, 112
        %v1791 = vpop.permute.xlu0 %1790
        %1792 = vrot.lane.b32.xlu0 %v927, 112
        %v1793 = vpop.permute.xlu0 %1792
        %1794 = vrot.lane.b32.xlu0 %v929, 112
        %v1795 = vpop.permute.xlu0 %1794
        %v1796 = vsel %vm497, %v1733, %v1765
        %v1797 = vsel %vm497, %v1735, %v1767
        %v1798 = vsel %vm497, %v1737, %v1769
        %v1799 = vsel %vm497, %v1739, %v1771
        %v1800 = vsel %vm497, %v1741, %v1773
        %v1801 = vsel %vm497, %v1743, %v1775
        %v1802 = vsel %vm497, %v1745, %v1777
        %v1803 = vsel %vm497, %v1747, %v1779
        %v1804 = vsel %vm497, %v1749, %v1781
        %v1805 = vsel %vm497, %v1751, %v1783
        %v1806 = vsel %vm497, %v1753, %v1785
        %v1807 = vsel %vm497, %v1755, %v1787
        %v1808 = vsel %vm497, %v1757, %v1789
        %v1809 = vsel %vm497, %v1759, %v1791
        %v1810 = vsel %vm497, %v1761, %v1793
        %v1811 = vsel %vm497, %v1763, %v1795
        %v1812 = vsel %vm497, %v1765, %v1733
        %v1813 = vsel %vm497, %v1767, %v1735
        %v1814 = vsel %vm497, %v1769, %v1737
        %v1815 = vsel %vm497, %v1771, %v1739
        %v1816 = vsel %vm497, %v1773, %v1741
        %v1817 = vsel %vm497, %v1775, %v1743
        %v1818 = vsel %vm497, %v1777, %v1745
        %v1819 = vsel %vm497, %v1779, %v1747
        %v1820 = vsel %vm497, %v1781, %v1749
        %v1821 = vsel %vm497, %v1783, %v1751
        %v1822 = vsel %vm497, %v1785, %v1753
        %v1823 = vsel %vm497, %v1787, %v1755
        %v1824 = vsel %vm497, %v1789, %v1757
        %v1825 = vsel %vm497, %v1791, %v1759
        %v1826 = vsel %vm497, %v1793, %v1761
        %v1827 = vsel %vm497, %v1795, %v1763
        %v1828 = vmul.f32 %v1796, %v506
        %v1829 = vmul.f32 %v1812, %v510
        %v1830 = vmul.f32 %v1797, %v506
        %v1831 = vmul.f32 %v1813, %v510
        %v1832 = vmul.f32 %v1798, %v506
        %v1833 = vmul.f32 %v1814, %v510
        %v1834 = vmul.f32 %v1799, %v506
        %v1835 = vmul.f32 %v1815, %v510
        %v1836 = vmul.f32 %v1800, %v506
        %v1837 = vmul.f32 %v1816, %v510
        %v1838 = vmul.f32 %v1801, %v506
        %v1839 = vmul.f32 %v1817, %v510
        %v1840 = vmul.f32 %v1802, %v506
        %v1841 = vmul.f32 %v1818, %v510
        %v1842 = vmul.f32 %v1803, %v506
        %v1843 = vmul.f32 %v1819, %v510
        %v1844 = vmul.f32 %v1804, %v506
        %v1845 = vmul.f32 %v1820, %v510
        %v1846 = vmul.f32 %v1805, %v506
        %v1847 = vmul.f32 %v1821, %v510
        %v1848 = vmul.f32 %v1806, %v506
        %v1849 = vmul.f32 %v1822, %v510
        %v1850 = vmul.f32 %v1807, %v506
        %v1851 = vmul.f32 %v1823, %v510
        %v1852 = vmul.f32 %v1808, %v506
        %v1853 = vmul.f32 %v1824, %v510
        %v1854 = vmul.f32 %v1809, %v506
        %v1855 = vmul.f32 %v1825, %v510
        %v1856 = vmul.f32 %v1810, %v506
        %v1857 = vmul.f32 %v1826, %v510
        %v1858 = vmul.f32 %v1811, %v506
        %v1859 = vmul.f32 %v1827, %v510
        %1860 = vrot.lane.b32.xlu0 %v898, 111
        %v1861 = vpop.permute.xlu0 %1860
        %1862 = vrot.lane.b32.xlu0 %v900, 111
        %v1863 = vpop.permute.xlu0 %1862
        %1864 = vrot.lane.b32.xlu0 %v902, 111
        %v1865 = vpop.permute.xlu0 %1864
        %1866 = vrot.lane.b32.xlu0 %v904, 111
        %v1867 = vpop.permute.xlu0 %1866
        %1868 = vrot.lane.b32.xlu0 %v906, 111
        %v1869 = vpop.permute.xlu0 %1868
        %1870 = vrot.lane.b32.xlu0 %v908, 111
        %v1871 = vpop.permute.xlu0 %1870
        %1872 = vrot.lane.b32.xlu0 %v910, 111
        %v1873 = vpop.permute.xlu0 %1872
        %1874 = vrot.lane.b32.xlu0 %v912, 111
        %v1875 = vpop.permute.xlu0 %1874
        %1876 = vrot.lane.b32.xlu0 %v914, 111
        %v1877 = vpop.permute.xlu0 %1876
        %1878 = vrot.lane.b32.xlu0 %v916, 111
        %v1879 = vpop.permute.xlu0 %1878
        %1880 = vrot.lane.b32.xlu0 %v918, 111
        %v1881 = vpop.permute.xlu0 %1880
        %1882 = vrot.lane.b32.xlu0 %v920, 111
        %v1883 = vpop.permute.xlu0 %1882
        %1884 = vrot.lane.b32.xlu0 %v922, 111
        %v1885 = vpop.permute.xlu0 %1884
        %1886 = vrot.lane.b32.xlu0 %v924, 111
        %v1887 = vpop.permute.xlu0 %1886
        %1888 = vrot.lane.b32.xlu0 %v926, 111
        %v1889 = vpop.permute.xlu0 %1888
        %1890 = vrot.lane.b32.xlu0 %v928, 111
        %v1891 = vpop.permute.xlu0 %1890
        %1892 = vrot.lane.b32.xlu0 %v899, 111
        %v1893 = vpop.permute.xlu0 %1892
        %1894 = vrot.lane.b32.xlu0 %v901, 111
        %v1895 = vpop.permute.xlu0 %1894
        %1896 = vrot.lane.b32.xlu0 %v903, 111
        %v1897 = vpop.permute.xlu0 %1896
        %1898 = vrot.lane.b32.xlu0 %v905, 111
        %v1899 = vpop.permute.xlu0 %1898
        %1900 = vrot.lane.b32.xlu0 %v907, 111
        %v1901 = vpop.permute.xlu0 %1900
        %1902 = vrot.lane.b32.xlu0 %v909, 111
        %v1903 = vpop.permute.xlu0 %1902
        %1904 = vrot.lane.b32.xlu0 %v911, 111
        %v1905 = vpop.permute.xlu0 %1904
        %1906 = vrot.lane.b32.xlu0 %v913, 111
        %v1907 = vpop.permute.xlu0 %1906
        %1908 = vrot.lane.b32.xlu0 %v915, 111
        %v1909 = vpop.permute.xlu0 %1908
        %1910 = vrot.lane.b32.xlu0 %v917, 111
        %v1911 = vpop.permute.xlu0 %1910
        %1912 = vrot.lane.b32.xlu0 %v919, 111
        %v1913 = vpop.permute.xlu0 %1912
        %1914 = vrot.lane.b32.xlu0 %v921, 111
        %v1915 = vpop.permute.xlu0 %1914
        %1916 = vrot.lane.b32.xlu0 %v923, 111
        %v1917 = vpop.permute.xlu0 %1916
        %1918 = vrot.lane.b32.xlu0 %v925, 111
        %v1919 = vpop.permute.xlu0 %1918
        %1920 = vrot.lane.b32.xlu0 %v927, 111
        %v1921 = vpop.permute.xlu0 %1920
        %1922 = vrot.lane.b32.xlu0 %v929, 111
        %v1923 = vpop.permute.xlu0 %1922
        %v1924 = vsel %vm519, %v1861, %v1893
        %v1925 = vsel %vm519, %v1863, %v1895
        %v1926 = vsel %vm519, %v1865, %v1897
        %v1927 = vsel %vm519, %v1867, %v1899
        %v1928 = vsel %vm519, %v1869, %v1901
        %v1929 = vsel %vm519, %v1871, %v1903
        %v1930 = vsel %vm519, %v1873, %v1905
        %v1931 = vsel %vm519, %v1875, %v1907
        %v1932 = vsel %vm519, %v1877, %v1909
        %v1933 = vsel %vm519, %v1879, %v1911
        %v1934 = vsel %vm519, %v1881, %v1913
        %v1935 = vsel %vm519, %v1883, %v1915
        %v1936 = vsel %vm519, %v1885, %v1917
        %v1937 = vsel %vm519, %v1887, %v1919
        %v1938 = vsel %vm519, %v1889, %v1921
        %v1939 = vsel %vm519, %v1891, %v1923
        %v1940 = vsel %vm519, %v1893, %v1861
        %v1941 = vsel %vm519, %v1895, %v1863
        %v1942 = vsel %vm519, %v1897, %v1865
        %v1943 = vsel %vm519, %v1899, %v1867
        %v1944 = vsel %vm519, %v1901, %v1869
        %v1945 = vsel %vm519, %v1903, %v1871
        %v1946 = vsel %vm519, %v1905, %v1873
        %v1947 = vsel %vm519, %v1907, %v1875
        %v1948 = vsel %vm519, %v1909, %v1877
        %v1949 = vsel %vm519, %v1911, %v1879
        %v1950 = vsel %vm519, %v1913, %v1881
        %v1951 = vsel %vm519, %v1915, %v1883
        %v1952 = vsel %vm519, %v1917, %v1885
        %v1953 = vsel %vm519, %v1919, %v1887
        %v1954 = vsel %vm519, %v1921, %v1889
        %v1955 = vsel %vm519, %v1923, %v1891
        %v1956 = vmul.f32 %v1924, %v528
        %v1957 = vmul.f32 %v1940, %v532
        %v1958 = vmul.f32 %v1925, %v528
        %v1959 = vmul.f32 %v1941, %v532
        %v1960 = vmul.f32 %v1926, %v528
        %v1961 = vmul.f32 %v1942, %v532
        %v1962 = vmul.f32 %v1927, %v528
        %v1963 = vmul.f32 %v1943, %v532
        %v1964 = vmul.f32 %v1928, %v528
        %v1965 = vmul.f32 %v1944, %v532
        %v1966 = vmul.f32 %v1929, %v528
        %v1967 = vmul.f32 %v1945, %v532
        %v1968 = vmul.f32 %v1930, %v528
        %v1969 = vmul.f32 %v1946, %v532
        %v1970 = vmul.f32 %v1931, %v528
        %v1971 = vmul.f32 %v1947, %v532
        %v1972 = vmul.f32 %v1932, %v528
        %v1973 = vmul.f32 %v1948, %v532
        %v1974 = vmul.f32 %v1933, %v528
        %v1975 = vmul.f32 %v1949, %v532
        %v1976 = vmul.f32 %v1934, %v528
        %v1977 = vmul.f32 %v1950, %v532
        %v1978 = vmul.f32 %v1935, %v528
        %v1979 = vmul.f32 %v1951, %v532
        %v1980 = vmul.f32 %v1936, %v528
        %v1981 = vmul.f32 %v1952, %v532
        %v1982 = vmul.f32 %v1937, %v528
        %v1983 = vmul.f32 %v1953, %v532
        %v1984 = vmul.f32 %v1938, %v528
        %v1985 = vmul.f32 %v1954, %v532
        %v1986 = vmul.f32 %v1939, %v528
        %v1987 = vmul.f32 %v1955, %v532
        %v1988 = vpack.c.bf16 %v1028, %v1026
        %v1989 = vpack.c.bf16 %v1029, %v1027
        %v1990 = vpack.c.bf16 %v1032, %v1030
        %v1991 = vpack.c.bf16 %v1033, %v1031
        %v1992 = vpack.c.bf16 %v1036, %v1034
        %v1993 = vpack.c.bf16 %v1037, %v1035
        %v1994 = vpack.c.bf16 %v1040, %v1038
        %v1995 = vpack.c.bf16 %v1041, %v1039
        %v1996 = vpack.c.bf16 %v1044, %v1042
        %v1997 = vpack.c.bf16 %v1045, %v1043
        %v1998 = vpack.c.bf16 %v1048, %v1046
        %v1999 = vpack.c.bf16 %v1049, %v1047
        %v2000 = vpack.c.bf16 %v1052, %v1050
        %v2001 = vpack.c.bf16 %v1053, %v1051
        %v2002 = vpack.c.bf16 %v1056, %v1054
        %v2003 = vpack.c.bf16 %v1057, %v1055
        %v2004 = vpack.c.bf16 %v1156, %v1154
        %v2005 = vpack.c.bf16 %v1157, %v1155
        %v2006 = vpack.c.bf16 %v1160, %v1158
        %v2007 = vpack.c.bf16 %v1161, %v1159
        %v2008 = vpack.c.bf16 %v1164, %v1162
        %v2009 = vpack.c.bf16 %v1165, %v1163
        %v2010 = vpack.c.bf16 %v1168, %v1166
        %v2011 = vpack.c.bf16 %v1169, %v1167
        %v2012 = vpack.c.bf16 %v1172, %v1170
        %v2013 = vpack.c.bf16 %v1173, %v1171
        %v2014 = vpack.c.bf16 %v1176, %v1174
        %v2015 = vpack.c.bf16 %v1177, %v1175
        %v2016 = vpack.c.bf16 %v1180, %v1178
        %v2017 = vpack.c.bf16 %v1181, %v1179
        %v2018 = vpack.c.bf16 %v1184, %v1182
        %v2019 = vpack.c.bf16 %v1185, %v1183
        %v2020 = vpack.c.bf16 %v1284, %v1282
        %v2021 = vpack.c.bf16 %v1285, %v1283
        %v2022 = vpack.c.bf16 %v1288, %v1286
        %v2023 = vpack.c.bf16 %v1289, %v1287
        %v2024 = vpack.c.bf16 %v1292, %v1290
        %v2025 = vpack.c.bf16 %v1293, %v1291
        %v2026 = vpack.c.bf16 %v1296, %v1294
        %v2027 = vpack.c.bf16 %v1297, %v1295
        %v2028 = vpack.c.bf16 %v1300, %v1298
        %v2029 = vpack.c.bf16 %v1301, %v1299
        %v2030 = vpack.c.bf16 %v1304, %v1302
        %v2031 = vpack.c.bf16 %v1305, %v1303
        %v2032 = vpack.c.bf16 %v1308, %v1306
        %v2033 = vpack.c.bf16 %v1309, %v1307
        %v2034 = vpack.c.bf16 %v1312, %v1310
        %v2035 = vpack.c.bf16 %v1313, %v1311
        %v2036 = vpack.c.bf16 %v1412, %v1410
        %v2037 = vpack.c.bf16 %v1413, %v1411
        %v2038 = vpack.c.bf16 %v1416, %v1414
        %v2039 = vpack.c.bf16 %v1417, %v1415
        %v2040 = vpack.c.bf16 %v1420, %v1418
        %v2041 = vpack.c.bf16 %v1421, %v1419
        %v2042 = vpack.c.bf16 %v1424, %v1422
        %v2043 = vpack.c.bf16 %v1425, %v1423
        %v2044 = vpack.c.bf16 %v1428, %v1426
        %v2045 = vpack.c.bf16 %v1429, %v1427
        %v2046 = vpack.c.bf16 %v1432, %v1430
        %v2047 = vpack.c.bf16 %v1433, %v1431
        %v2048 = vpack.c.bf16 %v1436, %v1434
        %v2049 = vpack.c.bf16 %v1437, %v1435
        %v2050 = vpack.c.bf16 %v1440, %v1438
        %v2051 = vpack.c.bf16 %v1441, %v1439
        %v2052 = vpack.c.bf16 %v1446, %v1444
        %v2053 = vpack.c.bf16 %v1447, %v1445
        %v2054 = vpack.c.bf16 %v1450, %v1448
        %v2055 = vpack.c.bf16 %v1451, %v1449
        %v2056 = vpack.c.bf16 %v1454, %v1452
        %v2057 = vpack.c.bf16 %v1455, %v1453
        %v2058 = vpack.c.bf16 %v1458, %v1456
        %v2059 = vpack.c.bf16 %v1459, %v1457
        %v2060 = vpack.c.bf16 %v1462, %v1460
        %v2061 = vpack.c.bf16 %v1463, %v1461
        %v2062 = vpack.c.bf16 %v1466, %v1464
        %v2063 = vpack.c.bf16 %v1467, %v1465
        %v2064 = vpack.c.bf16 %v1470, %v1468
        %v2065 = vpack.c.bf16 %v1471, %v1469
        %v2066 = vpack.c.bf16 %v1474, %v1472
        %v2067 = vpack.c.bf16 %v1475, %v1473
        %v2068 = vpack.c.bf16 %v1574, %v1572
        %v2069 = vpack.c.bf16 %v1575, %v1573
        %v2070 = vpack.c.bf16 %v1578, %v1576
        %v2071 = vpack.c.bf16 %v1579, %v1577
        %v2072 = vpack.c.bf16 %v1582, %v1580
        %v2073 = vpack.c.bf16 %v1583, %v1581
        %v2074 = vpack.c.bf16 %v1586, %v1584
        %v2075 = vpack.c.bf16 %v1587, %v1585
        %v2076 = vpack.c.bf16 %v1590, %v1588
        %v2077 = vpack.c.bf16 %v1591, %v1589
        %v2078 = vpack.c.bf16 %v1594, %v1592
        %v2079 = vpack.c.bf16 %v1595, %v1593
        %v2080 = vpack.c.bf16 %v1598, %v1596
        %v2081 = vpack.c.bf16 %v1599, %v1597
        %v2082 = vpack.c.bf16 %v1602, %v1600
        %v2083 = vpack.c.bf16 %v1603, %v1601
        %v2084 = vpack.c.bf16 %v1702, %v1700
        %v2085 = vpack.c.bf16 %v1703, %v1701
        %v2086 = vpack.c.bf16 %v1706, %v1704
        %v2087 = vpack.c.bf16 %v1707, %v1705
        %v2088 = vpack.c.bf16 %v1710, %v1708
        %v2089 = vpack.c.bf16 %v1711, %v1709
        %v2090 = vpack.c.bf16 %v1714, %v1712
        %v2091 = vpack.c.bf16 %v1715, %v1713
        %v2092 = vpack.c.bf16 %v1718, %v1716
        %v2093 = vpack.c.bf16 %v1719, %v1717
        %v2094 = vpack.c.bf16 %v1722, %v1720
        %v2095 = vpack.c.bf16 %v1723, %v1721
        %v2096 = vpack.c.bf16 %v1726, %v1724
        %v2097 = vpack.c.bf16 %v1727, %v1725
        %v2098 = vpack.c.bf16 %v1730, %v1728
        %v2099 = vpack.c.bf16 %v1731, %v1729
        %v2100 = vpack.c.bf16 %v1830, %v1828
        %v2101 = vpack.c.bf16 %v1831, %v1829
        %v2102 = vpack.c.bf16 %v1834, %v1832
        %v2103 = vpack.c.bf16 %v1835, %v1833
        %v2104 = vpack.c.bf16 %v1838, %v1836
        %v2105 = vpack.c.bf16 %v1839, %v1837
        %v2106 = vpack.c.bf16 %v1842, %v1840
        %v2107 = vpack.c.bf16 %v1843, %v1841
        %v2108 = vpack.c.bf16 %v1846, %v1844
        %v2109 = vpack.c.bf16 %v1847, %v1845
        %v2110 = vpack.c.bf16 %v1850, %v1848
        %v2111 = vpack.c.bf16 %v1851, %v1849
        %v2112 = vpack.c.bf16 %v1854, %v1852
        %v2113 = vpack.c.bf16 %v1855, %v1853
        %v2114 = vpack.c.bf16 %v1858, %v1856
        %v2115 = vpack.c.bf16 %v1859, %v1857
        %v2116 = vpack.c.bf16 %v1958, %v1956
        %v2117 = vpack.c.bf16 %v1959, %v1957
        %v2118 = vpack.c.bf16 %v1962, %v1960
        %v2119 = vpack.c.bf16 %v1963, %v1961
        %v2120 = vpack.c.bf16 %v1966, %v1964
        %v2121 = vpack.c.bf16 %v1967, %v1965
        %v2122 = vpack.c.bf16 %v1970, %v1968
        %v2123 = vpack.c.bf16 %v1971, %v1969
        %v2124 = vpack.c.bf16 %v1974, %v1972
        %v2125 = vpack.c.bf16 %v1975, %v1973
        %v2126 = vpack.c.bf16 %v1978, %v1976
        %v2127 = vpack.c.bf16 %v1979, %v1977
        %v2128 = vpack.c.bf16 %v1982, %v1980
        %v2129 = vpack.c.bf16 %v1983, %v1981
        %v2130 = vpack.c.bf16 %v1986, %v1984
        %v2131 = vpack.c.bf16 %v1987, %v1985
        %v2132 = vld [vmem:[%s5] sm:$0xff]
        %v2133 = vld [vmem:[%s5 + $0x8] sm:$0xff]
        %v2134 = vld [vmem:[%s5 + $0x10] sm:$0xff]
        %v2135 = vld [vmem:[%s5 + $0x18] sm:$0xff]
        %v2136 = vld [vmem:[%s5 + $0x20] sm:$0xf]
        %v2137 = vld [vmem:[%s6] sm:$0xff]
        %2139 = vset.pattern.permute.xlu0 0
        %2140 = vperm.xlu0 %2139, %v2137
        %v2141 = vpop.permute.xlu0 %2140
        %v2148 = vunpack.c.l.b16 %v2132
        %v2149 = vunpack.c.h.b16 %v2132
        %v2150 = vunpack.c.l.b16 %v2133
        %v2151 = vunpack.c.h.b16 %v2133
        %v2152 = vunpack.c.l.b16 %v2134
        %v2153 = vunpack.c.h.b16 %v2134
        %v2154 = vunpack.c.l.b16 %v2135
        %v2155 = vunpack.c.h.b16 %v2135
        %v2156 = vunpack.c.l.b16 %v2136
        %v2157 = vpack.c.b16 %v2148, %v2148
        %v2158 = vpack.c.b16 %v2149, %v2149
        %v2159 = vpack.c.b16 %v2150, %v2150
        %v2160 = vpack.c.b16 %v2151, %v2151
        %v2161 = vpack.c.b16 %v2152, %v2152
        %v2162 = vpack.c.b16 %v2153, %v2153
        %v2163 = vpack.c.b16 %v2154, %v2154
        %v2164 = vpack.c.b16 %v2155, %v2155
        %v2165 = vpack.c.b16 %v2156, %v2156
        %2175 = vmatprep.subr.bf16.mxu0 %v1989
        %2176 = vmatpush1.bf16.msra.mxu0 %v1988
        %2177 = vmatprep.subr.bf16.mxu0 %v1991
        %2178 = vmatpush1.bf16.msra.mxu0 %v1990
        %2179 = vmatprep.subr.bf16.mxu0 %v1993
        %2180 = vmatpush1.bf16.msra.mxu0 %v1992
        %2181 = vmatprep.subr.bf16.mxu0 %v1995
        %2182 = vmatpush1.bf16.msra.mxu0 %v1994
        %2183 = vmatprep.subr.bf16.mxu0 %v1997
        %2184 = vmatpush1.bf16.msra.mxu0 %v1996
        %2185 = vmatprep.subr.bf16.mxu0 %v1999
        %2186 = vmatpush1.bf16.msra.mxu0 %v1998
        %2187 = vmatprep.subr.bf16.mxu0 %v2001
        %2188 = vmatpush1.bf16.msra.mxu0 %v2000
        %2189 = vmatprep.subr.bf16.mxu0 %v2003
        %2190 = vmatpush1.bf16.msra.mxu0 %v2002
        %2191 = vmatprep.subr.bf16.mxu0 %v2005
        %2192 = vmatpush1.bf16.msra.mxu0 %v2004
        %2193 = vmatprep.subr.bf16.mxu0 %v2007
        %2194 = vmatpush1.bf16.msra.mxu0 %v2006
        %2195 = vmatprep.subr.bf16.mxu0 %v2009
        %2196 = vmatpush1.bf16.msra.mxu0 %v2008
        %2197 = vmatprep.subr.bf16.mxu0 %v2011
        %2198 = vmatpush1.bf16.msra.mxu0 %v2010
        %2199 = vmatprep.subr.bf16.mxu0 %v2013
        %2200 = vmatpush1.bf16.msra.mxu0 %v2012
        %2201 = vmatprep.subr.bf16.mxu0 %v2015
        %2202 = vmatpush1.bf16.msra.mxu0 %v2014
        %2203 = vmatprep.subr.bf16.mxu0 %v2017
        %2204 = vmatpush1.bf16.msra.mxu0 %v2016
        %2205 = vmatprep.subr.bf16.mxu0 %v2019
        %2206 = vmatpush1.bf16.msra.mxu0 %v2018
        %2207 = vmatprep.mubr.bf16.mxu0 %v2158
        %2208 = vmatmul.mubr.bf16.gmra.mrb[0].mxu0 %v2157
        %v2209 = vpop.f32.mrb[0].mxu0
        %v2210 = vadd.f32 %v2141, %v2209
        %v2211 = vpop.f32.mrb[0].mxu0
        %v2212 = vadd.f32 %v2141, %v2211
        %v2213 = vpop.f32.mrb[0].mxu0
        %v2214 = vpop.f32.mrb[0].mxu0
        %2215 = vdwg.mxu0
        %2216 = vmatprep.subr.bf16.mxu0 %v2021
        %2217 = vmatpush1.bf16.msra.mxu0 %v2020
        %2218 = vmatprep.subr.bf16.mxu0 %v2023
        %2219 = vmatpush1.bf16.msra.mxu0 %v2022
        %2220 = vmatprep.subr.bf16.mxu0 %v2025
        %2221 = vmatpush1.bf16.msra.mxu0 %v2024
        %2222 = vmatprep.subr.bf16.mxu0 %v2027
        %2223 = vmatpush1.bf16.msra.mxu0 %v2026
        %2224 = vmatprep.subr.bf16.mxu0 %v2029
        %2225 = vmatpush1.bf16.msra.mxu0 %v2028
        %2226 = vmatprep.subr.bf16.mxu0 %v2031
        %2227 = vmatpush1.bf16.msra.mxu0 %v2030
        %2228 = vmatprep.subr.bf16.mxu0 %v2033
        %2229 = vmatpush1.bf16.msra.mxu0 %v2032
        %2230 = vmatprep.subr.bf16.mxu0 %v2035
        %2231 = vmatpush1.bf16.msra.mxu0 %v2034
        %2232 = vmatprep.subr.bf16.mxu0 %v2037
        %2233 = vmatpush1.bf16.msra.mxu0 %v2036
        %2234 = vmatprep.subr.bf16.mxu0 %v2039
        %2235 = vmatpush1.bf16.msra.mxu0 %v2038
        %2236 = vmatprep.subr.bf16.mxu0 %v2041
        %2237 = vmatpush1.bf16.msra.mxu0 %v2040
        %2238 = vmatprep.subr.bf16.mxu0 %v2043
        %2239 = vmatpush1.bf16.msra.mxu0 %v2042
        %2240 = vmatprep.subr.bf16.mxu0 %v2045
        %2241 = vmatpush1.bf16.msra.mxu0 %v2044
        %2242 = vmatprep.subr.bf16.mxu0 %v2047
        %2243 = vmatpush1.bf16.msra.mxu0 %v2046
        %2244 = vmatprep.subr.bf16.mxu0 %v2049
        %2245 = vmatpush1.bf16.msra.mxu0 %v2048
        %2246 = vmatprep.subr.bf16.mxu0 %v2051
        %2247 = vmatpush1.bf16.msra.mxu0 %v2050
        %2248 = vmatprep.mubr.bf16.mxu0 %v2160
        %2249 = vmatmul.mubr.bf16.gmra.mrb[0].mxu0 %v2159
        %v2250 = vpop.f32.mrb[0].mxu0
        %v2251 = vadd.f32 %v2210, %v2250
        %v2252 = vpop.f32.mrb[0].mxu0
        %v2253 = vadd.f32 %v2212, %v2252
        %v2254 = vpop.f32.mrb[0].mxu0
        %v2255 = vpop.f32.mrb[0].mxu0
        %2256 = vdwg.mxu0
        %2257 = vmatprep.subr.bf16.mxu0 %v2053
        %2258 = vmatpush1.bf16.msra.mxu0 %v2052
        %2259 = vmatprep.subr.bf16.mxu0 %v2055
        %2260 = vmatpush1.bf16.msra.mxu0 %v2054
        %2261 = vmatprep.subr.bf16.mxu0 %v2057
        %2262 = vmatpush1.bf16.msra.mxu0 %v2056
        %2263 = vmatprep.subr.bf16.mxu0 %v2059
        %2264 = vmatpush1.bf16.msra.mxu0 %v2058
        %2265 = vmatprep.subr.bf16.mxu0 %v2061
        %2266 = vmatpush1.bf16.msra.mxu0 %v2060
        %2267 = vmatprep.subr.bf16.mxu0 %v2063
        %2268 = vmatpush1.bf16.msra.mxu0 %v2062
        %2269 = vmatprep.subr.bf16.mxu0 %v2065
        %2270 = vmatpush1.bf16.msra.mxu0 %v2064
        %2271 = vmatprep.subr.bf16.mxu0 %v2067
        %2272 = vmatpush1.bf16.msra.mxu0 %v2066
        %2273 = vmatprep.subr.bf16.mxu0 %v2069
        %2274 = vmatpush1.bf16.msra.mxu0 %v2068
        %2275 = vmatprep.subr.bf16.mxu0 %v2071
        %2276 = vmatpush1.bf16.msra.mxu0 %v2070
        %2277 = vmatprep.subr.bf16.mxu0 %v2073
        %2278 = vmatpush1.bf16.msra.mxu0 %v2072
        %2279 = vmatprep.subr.bf16.mxu0 %v2075
        %2280 = vmatpush1.bf16.msra.mxu0 %v2074
        %2281 = vmatprep.subr.bf16.mxu0 %v2077
        %2282 = vmatpush1.bf16.msra.mxu0 %v2076
        %2283 = vmatprep.subr.bf16.mxu0 %v2079
        %2284 = vmatpush1.bf16.msra.mxu0 %v2078
        %2285 = vmatprep.subr.bf16.mxu0 %v2081
        %2286 = vmatpush1.bf16.msra.mxu0 %v2080
        %2287 = vmatprep.subr.bf16.mxu0 %v2083
        %2288 = vmatpush1.bf16.msra.mxu0 %v2082
        %2289 = vmatprep.mubr.bf16.mxu0 %v2162
        %2290 = vmatmul.mubr.bf16.gmra.mrb[0].mxu0 %v2161
        %v2291 = vpop.f32.mrb[0].mxu0
        %v2292 = vadd.f32 %v2251, %v2291
        %v2293 = vpop.f32.mrb[0].mxu0
        %v2294 = vadd.f32 %v2253, %v2293
        %v2295 = vpop.f32.mrb[0].mxu0
        %v2296 = vpop.f32.mrb[0].mxu0
        %2297 = vdwg.mxu0
        %2298 = vmatprep.subr.bf16.mxu0 %v2085
        %2299 = vmatpush1.bf16.msra.mxu0 %v2084
        %2300 = vmatprep.subr.bf16.mxu0 %v2087
        %2301 = vmatpush1.bf16.msra.mxu0 %v2086
        %2302 = vmatprep.subr.bf16.mxu0 %v2089
        %2303 = vmatpush1.bf16.msra.mxu0 %v2088
        %2304 = vmatprep.subr.bf16.mxu0 %v2091
        %2305 = vmatpush1.bf16.msra.mxu0 %v2090
        %2306 = vmatprep.subr.bf16.mxu0 %v2093
        %2307 = vmatpush1.bf16.msra.mxu0 %v2092
        %2308 = vmatprep.subr.bf16.mxu0 %v2095
        %2309 = vmatpush1.bf16.msra.mxu0 %v2094
        %2310 = vmatprep.subr.bf16.mxu0 %v2097
        %2311 = vmatpush1.bf16.msra.mxu0 %v2096
        %2312 = vmatprep.subr.bf16.mxu0 %v2099
        %2313 = vmatpush1.bf16.msra.mxu0 %v2098
        %2314 = vmatprep.subr.bf16.mxu0 %v2101
        %2315 = vmatpush1.bf16.msra.mxu0 %v2100
        %2316 = vmatprep.subr.bf16.mxu0 %v2103
        %2317 = vmatpush1.bf16.msra.mxu0 %v2102
        %2318 = vmatprep.subr.bf16.mxu0 %v2105
        %2319 = vmatpush1.bf16.msra.mxu0 %v2104
        %2320 = vmatprep.subr.bf16.mxu0 %v2107
        %2321 = vmatpush1.bf16.msra.mxu0 %v2106
        %2322 = vmatprep.subr.bf16.mxu0 %v2109
        %2323 = vmatpush1.bf16.msra.mxu0 %v2108
        %2324 = vmatprep.subr.bf16.mxu0 %v2111
        %2325 = vmatpush1.bf16.msra.mxu0 %v2110
        %2326 = vmatprep.subr.bf16.mxu0 %v2113
        %2327 = vmatpush1.bf16.msra.mxu0 %v2112
        %2328 = vmatprep.subr.bf16.mxu0 %v2115
        %2329 = vmatpush1.bf16.msra.mxu0 %v2114
        %2330 = vmatprep.mubr.bf16.mxu0 %v2164
        %2331 = vmatmul.mubr.bf16.gmra.mrb[0].mxu0 %v2163
        %v2332 = vpop.f32.mrb[0].mxu0
        %v2333 = vadd.f32 %v2292, %v2332
        %v2334 = vpop.f32.mrb[0].mxu0
        %v2335 = vadd.f32 %v2294, %v2334
        %v2336 = vpop.f32.mrb[0].mxu0
        %v2337 = vpop.f32.mrb[0].mxu0
        %2338 = vdwg.mxu0
        %2339 = vmatprep.subr.bf16.mxu0 %v2117
        %2340 = vmatpush1.bf16.msra.mxu0 %v2116
        %2341 = vmatprep.subr.bf16.mxu0 %v2119
        %2342 = vmatpush1.bf16.msra.mxu0 %v2118
        %2343 = vmatprep.subr.bf16.mxu0 %v2121
        %2344 = vmatpush1.bf16.msra.mxu0 %v2120
        %2345 = vmatprep.subr.bf16.mxu0 %v2123
        %2346 = vmatpush1.bf16.msra.mxu0 %v2122
        %2347 = vmatprep.subr.bf16.mxu0 %v2125
        %2348 = vmatpush1.bf16.msra.mxu0 %v2124
        %2349 = vmatprep.subr.bf16.mxu0 %v2127
        %2350 = vmatpush1.bf16.msra.mxu0 %v2126
        %2351 = vmatprep.subr.bf16.mxu0 %v2129
        %2352 = vmatpush1.bf16.msra.mxu0 %v2128
        %2353 = vmatprep.subr.bf16.mxu0 %v2131
        %2354 = vmatpush1.bf16.msra.mxu0 %v2130
        %2355 = vmatprep.subr.bf16.mxu0 0
        %2356 = vmatpush1.bf16.msra.mxu0 0
        %2357 = vmatprep.subr.bf16.mxu0 0
        %2358 = vmatpush1.bf16.msra.mxu0 0
        %2359 = vmatprep.subr.bf16.mxu0 0
        %2360 = vmatpush1.bf16.msra.mxu0 0
        %2361 = vmatprep.subr.bf16.mxu0 0
        %2362 = vmatpush1.bf16.msra.mxu0 0
        %2363 = vmatprep.subr.bf16.mxu0 0
        %2364 = vmatpush1.bf16.msra.mxu0 0
        %2365 = vmatprep.subr.bf16.mxu0 0
        %2366 = vmatpush1.bf16.msra.mxu0 0
        %2367 = vmatprep.subr.bf16.mxu0 0
        %2368 = vmatpush1.bf16.msra.mxu0 0
        %2369 = vmatprep.subr.bf16.mxu0 0
        %2370 = vmatpush1.bf16.msra.mxu0 0
        %2371 = vmatprep.mubr.bf16.mxu0 0
        %2372 = vmatmul.mubr.bf16.gmra.mrb[0].mxu0 %v2165
        %v2373 = vpop.f32.mrb[0].mxu0
        %v2374 = vadd.f32 %v2333, %v2373
        %v2375 = vpop.f32.mrb[0].mxu0
        %v2376 = vadd.f32 %v2335, %v2375
        %v2377 = vpop.f32.mrb[0].mxu0
        %v2378 = vpop.f32.mrb[0].mxu0
        %2379 = vdwg.mxu0
        %v2380 = vadd.f32 %v2374, 1.0
        %v2381 = vadd.f32 %v2376, 1.0
        %v2384 = vcombine.low %v2380, %v2381
        %v2386 = vmul.f32 %v341, %v2384
        %v2389 = vcombine.high %v2374, %v2376
        %v2391 = vadd.f32 %v2386, %v2389
        %2392 = vst [vmem:[%s286] sm:$0xff] %v2391
        %s2393 = sand.u32 %s186, 1
        %s2394 = scalar_lea.sflag [#allocation3], %s2393
        %s2395 = sand.u32 %s186, 1
        %s2396 = smul.addr %s2395, 8
        %s2397 = scalar_lea.vmem [#allocation2], %s2396
        // Predicated region
        $region49: #{tpu_custom_call.1} parent=47 // pred_check
          %p2398 = pneg %p196
        $region50: #{tpu_custom_call.1} parent=47 // pred_check_branch
          %2400 = sbr.rel (%p2398) target = $region52
        $region51: #{tpu_custom_call.1} parent=47 // pred_region
          %s2402 = ssub.s32 128, 128
          %2403 = vsyncadd %s2394, %s2402
          %s2404 = smul.addr %s21, 2
          %s2405 = smul.addr %s2404, 64
          %s2406 = scalar_lea.hbm %s7, %s2405
          %s2408 = sshll.u32 %s2397, 4
          %s2409 = int_to_ptr.vmem [resolvable:$true] %s2408
          %2411 = dma.vmem_to_hbm [thread:$0]  %s2409, 128, %s2406, %s2394
        $region52: #{tpu_custom_call.1} parent=47 // pred_fallthru
          _
      $region48: #{tpu_custom_call.1} parent=5 // pred_fallthru
        _
      %p2412 = scmp.le.s32.totalorder 2, %s16
      // Predicated region
      $region53: #{tpu_custom_call.1} parent=5 // pred_check
        %p2413 = pneg %p2412
      $region54: #{tpu_custom_call.1} parent=5 // pred_check_branch
        %2415 = sbr.rel (%p2413) target = $region56
      $region55: #{tpu_custom_call.1} parent=5 // pred_region
        %s2416 = ssub.s32 %s16, 2
        // Predicated region
        $region57: #{tpu_custom_call.1} parent=55 // pred_check
          %p2417 = pneg %p202
        $region58: #{tpu_custom_call.1} parent=55 // pred_check_branch
          %2419 = sbr.rel (%p2417) target = $region60
        $region59: #{tpu_custom_call.1} parent=55 // pred_region
          %s2420 = sand.u32 %s187, 1
          %s2421 = scalar_lea.sflag [#allocation3], %s2420
          %s2422 = sand.u32 %s187, 1
          %s2423 = smul.addr %s2422, 8
          %s2424 = scalar_lea.vmem [#allocation2], %s2423
          %2425 = dma.done %s2421, 128
        $region60: #{tpu_custom_call.1} parent=55 // pred_fallthru
          _
      $region56: #{tpu_custom_call.1} parent=5 // pred_fallthru
        _
    $region6: #{tpu_custom_call.1} parent=1 // loop_footer
      %s20 = sadd.s32 1, %s16
    $region7: #{tpu_custom_call.1} parent=1 // loop_footer_branch
      %15 = sbr.rel target = $region3
    $region8: #{tpu_custom_call.1} parent=1 // loop_exit
      _
    %2426 = vsyncpa [#allocation3], 1
    %s2427 = scalar_lea.sflag [#allocation3], 1
    %2428 = vsyncpa %s2427, 1

</llo_original>
